<compile_context>
chip_gen: v6e
topology: v6e:2x2x1
jax: 0.10.0
libtpu: 0.0.40
codegen_flags: <defaults>
</compile_context>

<pallas_src>
import numpy as np
import jax
import jax.numpy as jnp
from jax.experimental import pallas as pl
from jax.experimental.pallas import tpu as pltpu

LABEL_SMOOTH = 0.05  # nn.CrossEntropyLoss(label_smoothing=0.05)


def _criterion_kernel(tok_ref, maa_ref, logits_ref, pfull_ref, ptile_ref,
                      ncol_ref, nrow_ref, segc_ref, segr_ref, xpair_ref,
                      uam_ref, ao_ref, ae_ref, out_ref):
    f32 = jnp.float32
    j = pl.program_id(1)
    L = logits_ref.shape[1]
    V = logits_ref.shape[2]

    # ------------- per-batch (tile-invariant) terms, only at first tile -------
    @pl.when(j == 0)
    def _():
        # type loss: masked label-smoothed CE + accuracy
        logits = logits_ref[0].astype(f32)                 # (L, V)
        tok = tok_ref[0]                                   # (L, 1) int32
        maa = maa_ref[0].astype(f32)                       # (L, 1)

        m = jnp.max(logits, axis=1, keepdims=True)         # (L, 1)
        z = logits - m
        lse = jnp.log(jnp.sum(jnp.exp(z), axis=1, keepdims=True))
        logp = z - lse                                     # (L, V)

        col = jax.lax.broadcasted_iota(jnp.int32, (L, V), 1)
        onehot = (col == tok).astype(f32)                  # exact int compare
        logp_y = jnp.sum(logp * onehot, axis=1, keepdims=True)
        sum_logp = jnp.sum(logp, axis=1, keepdims=True)
        ce = -((1.0 - LABEL_SMOOTH) * logp_y + (LABEL_SMOOTH / V) * sum_logp)

        type_sum = jnp.sum(ce * maa, axis=(0, 1), keepdims=True)
        type_cnt = jnp.sum(maa, axis=(0, 1), keepdims=True)

        # argmax via min index among maxima (torch first-max tie-break).
        # f32 compare is exact while V < 2^24 (always true for protein vocabs).
        amax = jnp.min(jnp.where(logits == m, col.astype(f32), jnp.float32(V)),
                       axis=1, keepdims=True)
        type_corr = jnp.sum((amax == tok.astype(f32)).astype(f32) * maa,
                            axis=(0, 1), keepdims=True)

        # angle loss (diffmode == 'epsilon')
        uam = uam_ref[0].astype(f32)                       # (L, 3)
        da = ao_ref[0].astype(f32) - ae_ref[0].astype(f32)
        ang_sq = jnp.sum(da * da * uam, axis=(0, 1), keepdims=True)
        ang_cnt = jnp.sum(uam, axis=(0, 1), keepdims=True)

        out_ref[0, 0:1, :] = jnp.broadcast_to(type_sum, (1, 128))
        out_ref[0, 1:2, :] = jnp.broadcast_to(type_cnt, (1, 128))
        out_ref[0, 2:3, :] = jnp.broadcast_to(type_corr, (1, 128))
        out_ref[0, 3:5, :] = jnp.zeros((2, 128), f32)       # dist accumulators
        out_ref[0, 5:6, :] = jnp.broadcast_to(ang_sq, (1, 128))
        out_ref[0, 6:7, :] = jnp.broadcast_to(ang_cnt, (1, 128))
        out_ref[0, 7:8, :] = jnp.zeros((1, 128), f32)

    # ------------- per-(batch, column-tile) pairwise distance MSE -------------
    # Gram-matrix distances on the MXU (posm is zero-padded to 8 coords).
    p_full = pfull_ref[0]                                  # (L, 8)  native dtype
    p_tile = ptile_ref[0]                                  # (TN, 8) native dtype
    gram = jax.lax.dot_general(p_full, p_tile,
                               (((1,), (1,)), ((), ())),
                               preferred_element_type=f32)  # (L, TN)
    d2 = ncol_ref[0].astype(f32) + nrow_ref[0].astype(f32) - 2.0 * gram
    dist = jnp.sqrt(jnp.maximum(d2, 0.0))                  # clamp tiny negatives

    # fused boolean mask: same segment (pad folded in wrapper) & distance window
    dmask = (segc_ref[0] == segr_ref[0]) & (dist > 0.2) & (dist < 20.0)
    diff = dist - xpair_ref[0].astype(f32)
    dist_sq = jnp.sum(jnp.where(dmask, diff * diff, 0.0),
                      axis=(0, 1), keepdims=True)
    dist_cnt = jnp.sum(dmask.astype(f32), axis=(0, 1), keepdims=True)

    out_ref[0, 3:4, :] += jnp.broadcast_to(dist_sq, (1, 128))
    out_ref[0, 4:5, :] += jnp.broadcast_to(dist_cnt, (1, 128))


def _pick_col_tile(L):
    """Largest lane-aligned column tile <= 512 that divides L (else full L)."""
    if L <= 512:
        return L
    for tn in (512, 384, 256, 128):
        if L % tn == 0:
            return tn
    return L  # L not a multiple of 128: fall back to untiled full extent


def pallas_partial_sums(tok, mask_aa, padding_mask, logits, pos, x_pair,
                        uam, angle_output, ang_epsilon):
    B, L, V = logits.shape
    f32 = jnp.float32

    # ---- cheap O(B*L) host-side glue (plain XLA) ----
    posm = pos[:, :, :3, :].mean(axis=2)                   # (B, L, 3) backbone mean
    posm_pad = jnp.pad(posm, ((0, 0), (0, 0), (0, 5)))     # (B, L, 8) for MXU Gram
    nsq = jnp.sum(posm.astype(f32) ** 2, axis=-1)          # (B, L) |p|^2 in f32
    n_col = nsq[..., None]                                 # (B, L, 1)
    n_row = nsq[:, None, :]                                # (B, 1, L)

    # segment ids from token stream (replaces the O(L^2) in-kernel trick):
    # token 0 opens, token 2 closes; position is "inside" iff #opens > #closes.
    tok_i = tok.astype(jnp.int32)
    cs = jnp.cumsum((tok_i == 0).astype(jnp.int32), axis=-1)
    cend = jnp.cumsum((tok_i == 2).astype(jnp.int32), axis=-1)
    inside = (cs > cend) & jnp.logical_not(padding_mask.astype(bool))
    # distinct sentinels (-1 vs -2) so any pair involving an outside/padded
    # position fails the single equality test in the kernel.
    segc = jnp.where(inside, cs, -1).astype(jnp.int32)[..., None]   # (B, L, 1)
    segr = jnp.where(inside, cs, -2).astype(jnp.int32)[:, None, :]  # (B, 1, L)

    tok_col = tok_i[..., None]                             # (B, L, 1)
    maa_col = mask_aa.reshape(B, L, 1).astype(f32)         # (B, L, 1)
    uam_f = uam.astype(f32)                                # (B, L, 3) tiny

    TN = _pick_col_tile(L)
    NT = L // TN

    out = pl.pallas_call(
        _criterion_kernel,
        out_shape=jax.ShapeDtypeStruct((B, 8, 128), f32),
        grid=(B, NT),
        in_specs=[
            pl.BlockSpec((1, L, 1), lambda b, j: (b, 0, 0)),    # tokens (col)
            pl.BlockSpec((1, L, 1), lambda b, j: (b, 0, 0)),    # mask_aa (col)
            pl.BlockSpec((1, L, V), lambda b, j: (b, 0, 0)),    # logits
            pl.BlockSpec((1, L, 8), lambda b, j: (b, 0, 0)),    # posm rows (full)
            pl.BlockSpec((1, TN, 8), lambda b, j: (b, j, 0)),   # posm column tile
            pl.BlockSpec((1, L, 1), lambda b, j: (b, 0, 0)),    # |p|^2 column
            pl.BlockSpec((1, 1, TN), lambda b, j: (b, 0, j)),   # |p|^2 row tile
            pl.BlockSpec((1, L, 1), lambda b, j: (b, 0, 0)),    # seg-id column
            pl.BlockSpec((1, 1, TN), lambda b, j: (b, 0, j)),   # seg-id row tile
            pl.BlockSpec((1, L, TN), lambda b, j: (b, 0, j)),   # x_pair col tile
            pl.BlockSpec((1, L, 3), lambda b, j: (b, 0, 0)),    # unified_angle_mask
            pl.BlockSpec((1, L, 3), lambda b, j: (b, 0, 0)),    # angle_output
            pl.BlockSpec((1, L, 3), lambda b, j: (b, 0, 0)),    # ang_epsilon
        ],
        out_specs=pl.BlockSpec((1, 8, 128), lambda b, j: (b, 0, 0)),
        compiler_params=pltpu.CompilerParams(
            dimension_semantics=("parallel", "arbitrary")),
    )(tok_col, maa_col, logits, posm_pad, posm_pad, n_col, n_row,
      segc, segr, x_pair, uam_f, angle_output, ang_epsilon)

    return out[:, :, 0].sum(axis=0)   # (8,) partial sums over batch


def protein_mae_dist_pde_criterions(batch_data, output_dict, args):
    """Forward of ProteinMAEDistPDECriterions (diffmode='epsilon', lamb_*=0)."""
    sums = pallas_partial_sums(
        batch_data['x'], output_dict['mask_aa'], output_dict['padding_mask'],
        output_dict['x'], batch_data['pos'], output_dict['x_pair'],
        output_dict['unified_angle_mask'],
        output_dict['angle_output'], output_dict['ang_epsilon'])

    type_sum, type_cnt, type_corr, dist_sq, dist_cnt, ang_sq, ang_cnt = [
        sums[i] for i in range(7)]

    type_loss = jnp.where(type_cnt > 0, type_sum / type_cnt, 0.0) * args['atom_loss_coeff']
    type_acc = jnp.where(type_cnt > 0, type_corr / type_cnt, 0.0)
    dist_loss = jnp.where(dist_cnt > 0, dist_sq / dist_cnt, 0.0)
    angle_loss = jnp.where(ang_cnt > 0, ang_sq / ang_cnt, 0.0)

    # TODO(synk): compute_terminal_ism_loss / compute_PDE_q_loss /
    # compute_pde_control_loss / VESDE are not defined in the provided source;
    # with lamb_ism == lamb_pde_q == lamb_pde_control == 0 the reference forward
    # returns zero for those terms, which is what is reproduced here.
    zero = jnp.float32(0.0)
    terminal_ism_loss, pde_q_loss, pde_control_loss = zero, zero, zero

    loss = (type_loss + 5.0 * angle_loss
            + args['lamb_ism'] * terminal_ism_loss
            + args['lamb_pde_q'] * pde_q_loss
            + args['lamb_pde_control'] * pde_control_loss
            + dist_loss)
    return loss, {'total_loss': loss, 'loss_type': type_loss,
                  'loss_angle': angle_loss, 'loss_ism': terminal_ism_loss,
                  'pde_q_loss': pde_q_loss, 'pde_control_loss': pde_control_loss,
                  'loss_dist': dist_loss, 'type_acc': type_acc}


def reference_losses(batch_data, output_dict, args):
    """Plain-JAX reference of the same forward (for a numeric sanity check)."""
    eps = LABEL_SMOOTH
    x = batch_data['x']
    logits = output_dict['x'].astype(jnp.float32)
    V = logits.shape[-1]
    maa = output_dict['mask_aa'][..., 0].astype(bool)

    logp = jax.nn.log_softmax(logits, axis=-1)
    onehot = jax.nn.one_hot(x, V, dtype=jnp.float32)
    ce = -((1 - eps) * jnp.sum(logp * onehot, -1) + (eps / V) * jnp.sum(logp, -1))
    mcnt = maa.sum()
    type_loss = jnp.where(mcnt > 0, (ce * maa).sum() / mcnt, 0.0) * args['atom_loss_coeff']
    pred = jnp.argmax(logits, -1)
    type_acc = jnp.where(mcnt > 0, ((pred == x) & maa).sum() / mcnt, 0.0)

    pos = batch_data['pos'][:, :, :3, :].mean(axis=2)
    delta = pos[:, :, None, :] - pos[:, None, :, :]
    ori_dist = jnp.sqrt((delta ** 2).sum(-1))
    pad = output_dict['padding_mask'].astype(bool)
    dist_mask = ~(pad[:, None, :] | pad[:, :, None])
    dist_filter = (ori_dist > 0.2) & (ori_dist < 20.0)
    is0 = (x == 0).astype(jnp.int32)
    is2 = (x == 2).astype(jnp.int32)
    cs = jnp.cumsum(is0, -1)
    ced = jnp.cumsum(is2, -1)
    inside = cs > ced
    pair_aa = inside[:, :, None] & inside[:, None, :] & (cs[:, :, None] == cs[:, None, :])
    dm = (dist_mask & dist_filter & pair_aa).astype(jnp.float32)
    dcnt = dm.sum()
    x_pair = output_dict['x_pair'].astype(jnp.float32)
    dist_loss = jnp.where(dcnt > 0, (((ori_dist - x_pair) ** 2) * dm).sum() / dcnt, 0.0)

    uam = output_dict['unified_angle_mask'].astype(jnp.float32)
    acnt = uam.sum()
    ao = output_dict['angle_output'].astype(jnp.float32)
    ae = output_dict['ang_epsilon'].astype(jnp.float32)
    angle_loss = jnp.where(acnt > 0, (((ao - ae) ** 2) * uam).sum() / acnt, 0.0)

    loss = type_loss + 5.0 * angle_loss + dist_loss
    return loss, type_loss, type_acc, dist_loss, angle_loss


if __name__ == "__main__":
    key = jax.random.PRNGKey(0)
    B, L, V, A = 2, 16, 32, 4
    args = dict(lamb_ism=0.0, lamb_pde_q=0.0, lamb_pde_control=0.0,
                diffmode='epsilon', atom_loss_coeff=1.0)

    ks = jax.random.split(key, 10)
    # well-formed packed sequences: [BOS(0), body..., EOS(2), BOS(0), body..., EOS(2), pad(1)...]
    tok = jax.random.randint(ks[0], (B, L), 3, V)
    tok = tok.at[:, 0].set(0).at[:, 7].set(2).at[:, 8].set(0).at[:, 13].set(2)
    tok = tok.at[:, 14:].set(1)
    padding_mask = jnp.zeros((B, L), jnp.bool_).at[:, 14:].set(True)

    pos = jax.random.uniform(ks[1], (B, L, A, 3), minval=0.0, maxval=8.0)
    ang = jax.random.normal(ks[2], (B, L, 3), dtype=jnp.float32)
    logits = jax.random.normal(ks[3], (B, L, V), dtype=jnp.float32)
    mask_aa = (jax.random.uniform(ks[4], (B, L, 1)) < 0.4).astype(jnp.float32)
    mask_aa = mask_aa.at[:, 14:, :].set(0.0).at[0, 1, 0].set(1.0)
    x_pair = jax.random.uniform(ks[5], (B, L, L), minval=0.0, maxval=15.0)
    uam = (jax.random.uniform(ks[6], (B, L, 3)) < 0.5).at[0, 1, 0].set(True)
    angle_output = jax.random.normal(ks[7], (B, L, 3), dtype=jnp.float32)
    ang_epsilon = jax.random.normal(ks[8], (B, L, 3), dtype=jnp.float32)

    batch_data = {'x': tok, 'pos': pos, 'ang': ang}
    output_dict = {'x': logits, 'mask_aa': mask_aa, 'padding_mask': padding_mask,
                   'x_pair': x_pair, 'unified_angle_mask': uam,
                   'angle_output': angle_output, 'ang_epsilon': ang_epsilon}

    loss, logd = protein_mae_dist_pde_criterions(batch_data, output_dict, args)
    loss = jax.block_until_ready(loss)

    ref_loss, ref_type, ref_acc, ref_dist, ref_angle = reference_losses(
        batch_data, output_dict, args)
    np.testing.assert_allclose(float(logd['loss_type']), float(ref_type), rtol=1e-4, atol=1e-4)
    np.testing.assert_allclose(float(logd['type_acc']), float(ref_acc), rtol=1e-4, atol=1e-4)
    # dist uses the MXU Gram-matrix form; allow slightly looser tolerance.
    np.testing.assert_allclose(float(logd['loss_dist']), float(ref_dist), rtol=5e-4, atol=5e-4)
    np.testing.assert_allclose(float(logd['loss_angle']), float(ref_angle), rtol=1e-4, atol=1e-4)
    np.testing.assert_allclose(float(loss), float(ref_loss), rtol=5e-4, atol=5e-4)

    print("KERNEL_OK")
</pallas_src>

<mosaic_0001>
module attributes {stable_mosaic.version = 11 : i64} {
  func.func @_criterion_kernel(%arg0: i32, %arg1: i32, %arg2: memref<1x16x1xi32, #tpu.memory_space<vmem>>, %arg3: memref<1x16x1xf32, #tpu.memory_space<vmem>>, %arg4: memref<1x16x32xf32, #tpu.memory_space<vmem>>, %arg5: memref<1x16x8xf32, #tpu.memory_space<vmem>>, %arg6: memref<1x16x8xf32, #tpu.memory_space<vmem>>, %arg7: memref<1x16x1xf32, #tpu.memory_space<vmem>>, %arg8: memref<1x1x16xf32, #tpu.memory_space<vmem>>, %arg9: memref<1x16x1xi32, #tpu.memory_space<vmem>>, %arg10: memref<1x1x16xi32, #tpu.memory_space<vmem>>, %arg11: memref<1x16x16xf32, #tpu.memory_space<vmem>>, %arg12: memref<1x16x3xf32, #tpu.memory_space<vmem>>, %arg13: memref<1x16x3xf32, #tpu.memory_space<vmem>>, %arg14: memref<1x16x3xf32, #tpu.memory_space<vmem>>, %arg15: memref<1x8x128xf32, #tpu.memory_space<vmem>>) attributes {dimension_semantics = [#tpu.dimension_semantics<parallel>, #tpu.dimension_semantics<arbitrary>], iteration_bounds = array<i64: 2, 1>, scalar_prefetch = 0 : i64, scratch_operands = 0 : i64, tpu.core_type = #tpu.core_type<tc>, window_params = [{transform_indices = @transform_0, window_bounds = array<i64: 1, 16, 1>}, {transform_indices = @transform_1, window_bounds = array<i64: 1, 16, 1>}, {transform_indices = @transform_2, window_bounds = array<i64: 1, 16, 32>}, {transform_indices = @transform_3, window_bounds = array<i64: 1, 16, 8>}, {transform_indices = @transform_4, window_bounds = array<i64: 1, 16, 8>}, {transform_indices = @transform_5, window_bounds = array<i64: 1, 16, 1>}, {transform_indices = @transform_6, window_bounds = array<i64: 1, 1, 16>}, {transform_indices = @transform_7, window_bounds = array<i64: 1, 16, 1>}, {transform_indices = @transform_8, window_bounds = array<i64: 1, 1, 16>}, {transform_indices = @transform_9, window_bounds = array<i64: 1, 16, 16>}, {transform_indices = @transform_10, window_bounds = array<i64: 1, 16, 3>}, {transform_indices = @transform_11, window_bounds = array<i64: 1, 16, 3>}, {transform_indices = @transform_12, window_bounds = array<i64: 1, 16, 3>}, {transform_indices = @transform_13, window_bounds = array<i64: 1, 8, 128>}]} {
    %c0_i32 = arith.constant 0 : i32
    %0 = arith.cmpi eq, %arg1, %c0_i32 : i32
    %1 = arith.extui %0 : i1 to i32
    %c0_i32_0 = arith.constant 0 : i32
    %2 = arith.cmpi ne, %1, %c0_i32_0 : i32
    scf.if %2 {
      %c0_38 = arith.constant 0 : index
      %c0_39 = arith.constant 0 : index
      %c0_40 = arith.constant 0 : index
      %68 = vector.load %arg4[%c0_38, %c0_39, %c0_40] : memref<1x16x32xf32, #tpu.memory_space<vmem>>, vector<1x16x32xf32>
      %69 = vector.shape_cast %68 : vector<1x16x32xf32> to vector<16x32xf32>
      %c0_41 = arith.constant 0 : index
      %c0_42 = arith.constant 0 : index
      %c0_43 = arith.constant 0 : index
      %70 = vector.load %arg2[%c0_41, %c0_42, %c0_43] : memref<1x16x1xi32, #tpu.memory_space<vmem>>, vector<1x16x1xi32>
      %71 = vector.shape_cast %70 : vector<1x16x1xi32> to vector<16x1xi32>
      %c0_44 = arith.constant 0 : index
      %c0_45 = arith.constant 0 : index
      %c0_46 = arith.constant 0 : index
      %72 = vector.load %arg3[%c0_44, %c0_45, %c0_46] : memref<1x16x1xf32, #tpu.memory_space<vmem>>, vector<1x16x1xf32>
      %73 = vector.shape_cast %72 : vector<1x16x1xf32> to vector<16x1xf32>
      %cst_47 = arith.constant dense<0xFF800000> : vector<16xf32>
      %74 = vector.multi_reduction <maximumf>, %69, %cst_47 [1] : vector<16x32xf32> to vector<16xf32>
      %75 = vector.shape_cast %74 : vector<16xf32> to vector<16x1xf32>
      %76 = vector.broadcast %75 : vector<16x1xf32> to vector<16x32xf32>
      %77 = arith.subf %69, %76 : vector<16x32xf32>
      %78 = math.exp %77 : vector<16x32xf32>
      %cst_48 = arith.constant dense<0.000000e+00> : vector<16xf32>
      %79 = vector.multi_reduction <add>, %78, %cst_48 [1] : vector<16x32xf32> to vector<16xf32>
      %80 = vector.shape_cast %79 : vector<16xf32> to vector<16x1xf32>
      %81 = math.log %80 : vector<16x1xf32>
      %82 = vector.broadcast %81 : vector<16x1xf32> to vector<16x32xf32>
      %83 = arith.subf %77, %82 : vector<16x32xf32>
      %84 = tpu.iota {dimensions = array<i32: 1>} : vector<16x32xi32>
      %85 = vector.broadcast %71 : vector<16x1xi32> to vector<16x32xi32>
      %86 = arith.cmpi eq, %84, %85 : vector<16x32xi32>
      %87 = arith.extui %86 : vector<16x32xi1> to vector<16x32xi32>
      %88 = arith.sitofp %87 : vector<16x32xi32> to vector<16x32xf32>
      %89 = arith.mulf %83, %88 : vector<16x32xf32>
      %cst_49 = arith.constant dense<0.000000e+00> : vector<16xf32>
      %90 = vector.multi_reduction <add>, %89, %cst_49 [1] : vector<16x32xf32> to vector<16xf32>
      %91 = vector.shape_cast %90 : vector<16xf32> to vector<16x1xf32>
      %cst_50 = arith.constant dense<0.000000e+00> : vector<16xf32>
      %92 = vector.multi_reduction <add>, %83, %cst_50 [1] : vector<16x32xf32> to vector<16xf32>
      %93 = vector.shape_cast %92 : vector<16xf32> to vector<16x1xf32>
      %cst_51 = arith.constant 0.949999988 : f32
      %94 = vector.broadcast %cst_51 : f32 to vector<16x1xf32>
      %95 = arith.mulf %94, %91 : vector<16x1xf32>
      %cst_52 = arith.constant 1.562500e-03 : f32
      %96 = vector.broadcast %cst_52 : f32 to vector<16x1xf32>
      %97 = arith.mulf %96, %93 : vector<16x1xf32>
      %98 = arith.addf %95, %97 : vector<16x1xf32>
      %cst_53 = arith.constant 0.000000e+00 : f32
      %99 = vector.broadcast %cst_53 : f32 to vector<16x1xf32>
      %100 = arith.subf %99, %98 : vector<16x1xf32>
      %101 = arith.mulf %100, %73 : vector<16x1xf32>
      %102 = vector.shape_cast %101 : vector<16x1xf32> to vector<1x16x1xf32>
      %cst_54 = arith.constant dense<0.000000e+00> : vector<1xf32>
      %103 = vector.multi_reduction <add>, %102, %cst_54 [1, 2] : vector<1x16x1xf32> to vector<1xf32>
      %104 = vector.shape_cast %103 : vector<1xf32> to vector<1x1x1xf32>
      %105 = vector.extract %104[0, 0, 0] : f32 from vector<1x1x1xf32>
      %106 = vector.broadcast %105 : f32 to vector<1x1xf32>
      %107 = vector.shape_cast %73 : vector<16x1xf32> to vector<1x16x1xf32>
      %cst_55 = arith.constant dense<0.000000e+00> : vector<1xf32>
      %108 = vector.multi_reduction <add>, %107, %cst_55 [1, 2] : vector<1x16x1xf32> to vector<1xf32>
      %109 = vector.shape_cast %108 : vector<1xf32> to vector<1x1x1xf32>
      %110 = vector.extract %109[0, 0, 0] : f32 from vector<1x1x1xf32>
      %111 = vector.broadcast %110 : f32 to vector<1x1xf32>
      %112 = vector.broadcast %75 : vector<16x1xf32> to vector<16x32xf32>
      %113 = arith.cmpf oeq, %69, %112 : vector<16x32xf32>
      %114 = arith.sitofp %84 : vector<16x32xi32> to vector<16x32xf32>
      %cst_56 = arith.constant 3.200000e+01 : f32
      %115 = vector.broadcast %cst_56 : f32 to vector<16x32xf32>
      %116 = arith.select %113, %114, %115 : vector<16x32xi1>, vector<16x32xf32>
      %cst_57 = arith.constant dense<0x7F800000> : vector<16xf32>
      %117 = vector.multi_reduction <minimumf>, %116, %cst_57 [1] : vector<16x32xf32> to vector<16xf32>
      %118 = vector.shape_cast %117 : vector<16xf32> to vector<16x1xf32>
      %119 = arith.sitofp %71 : vector<16x1xi32> to vector<16x1xf32>
      %120 = arith.cmpf oeq, %118, %119 : vector<16x1xf32>
      %121 = arith.extui %120 : vector<16x1xi1> to vector<16x1xi32>
      %122 = arith.sitofp %121 : vector<16x1xi32> to vector<16x1xf32>
      %123 = arith.mulf %122, %73 : vector<16x1xf32>
      %124 = vector.shape_cast %123 : vector<16x1xf32> to vector<1x16x1xf32>
      %cst_58 = arith.constant dense<0.000000e+00> : vector<1xf32>
      %125 = vector.multi_reduction <add>, %124, %cst_58 [1, 2] : vector<1x16x1xf32> to vector<1xf32>
      %126 = vector.shape_cast %125 : vector<1xf32> to vector<1x1x1xf32>
      %127 = vector.extract %126[0, 0, 0] : f32 from vector<1x1x1xf32>
      %128 = vector.broadcast %127 : f32 to vector<1x1xf32>
      %c0_59 = arith.constant 0 : index
      %c0_60 = arith.constant 0 : index
      %c0_61 = arith.constant 0 : index
      %129 = vector.load %arg12[%c0_59, %c0_60, %c0_61] : memref<1x16x3xf32, #tpu.memory_space<vmem>>, vector<1x16x3xf32>
      %130 = vector.shape_cast %129 : vector<1x16x3xf32> to vector<16x3xf32>
      %c0_62 = arith.constant 0 : index
      %c0_63 = arith.constant 0 : index
      %c0_64 = arith.constant 0 : index
      %131 = vector.load %arg13[%c0_62, %c0_63, %c0_64] : memref<1x16x3xf32, #tpu.memory_space<vmem>>, vector<1x16x3xf32>
      %132 = vector.shape_cast %131 : vector<1x16x3xf32> to vector<16x3xf32>
      %c0_65 = arith.constant 0 : index
      %c0_66 = arith.constant 0 : index
      %c0_67 = arith.constant 0 : index
      %133 = vector.load %arg14[%c0_65, %c0_66, %c0_67] : memref<1x16x3xf32, #tpu.memory_space<vmem>>, vector<1x16x3xf32>
      %134 = vector.shape_cast %133 : vector<1x16x3xf32> to vector<16x3xf32>
      %135 = arith.subf %132, %134 : vector<16x3xf32>
      %136 = arith.mulf %135, %135 : vector<16x3xf32>
      %137 = arith.mulf %136, %130 : vector<16x3xf32>
      %138 = vector.shape_cast %137 : vector<16x3xf32> to vector<1x16x3xf32>
      %cst_68 = arith.constant dense<0.000000e+00> : vector<1xf32>
      %139 = vector.multi_reduction <add>, %138, %cst_68 [1, 2] : vector<1x16x3xf32> to vector<1xf32>
      %140 = vector.shape_cast %139 : vector<1xf32> to vector<1x1x1xf32>
      %141 = vector.extract %140[0, 0, 0] : f32 from vector<1x1x1xf32>
      %142 = vector.broadcast %141 : f32 to vector<1x1xf32>
      %143 = vector.shape_cast %130 : vector<16x3xf32> to vector<1x16x3xf32>
      %cst_69 = arith.constant dense<0.000000e+00> : vector<1xf32>
      %144 = vector.multi_reduction <add>, %143, %cst_69 [1, 2] : vector<1x16x3xf32> to vector<1xf32>
      %145 = vector.shape_cast %144 : vector<1xf32> to vector<1x1x1xf32>
      %146 = vector.extract %145[0, 0, 0] : f32 from vector<1x1x1xf32>
      %147 = vector.broadcast %146 : f32 to vector<1x1xf32>
      %148 = vector.shape_cast %106 : vector<1x1xf32> to vector<1x1xf32>
      %149 = vector.broadcast %148 : vector<1x1xf32> to vector<1x128xf32>
      %c0_70 = arith.constant 0 : index
      %c0_71 = arith.constant 0 : index
      %c0_72 = arith.constant 0 : index
      %150 = vector.load %arg15[%c0_70, %c0_71, %c0_72] : memref<1x8x128xf32, #tpu.memory_space<vmem>>, vector<1x1x128xf32>
      %151 = vector.shape_cast %150 : vector<1x1x128xf32> to vector<1x128xf32>
      %152 = vector.shape_cast %149 : vector<1x128xf32> to vector<1x1x128xf32>
      tpu.vector_store %arg15[%c0_70, %c0_71, %c0_72], %152 {strides = array<i32>} : memref<1x8x128xf32, #tpu.memory_space<vmem>>, vector<1x1x128xf32>,
      %153 = vector.shape_cast %111 : vector<1x1xf32> to vector<1x1xf32>
      %154 = vector.broadcast %153 : vector<1x1xf32> to vector<1x128xf32>
      %c0_73 = arith.constant 0 : index
      %c1 = arith.constant 1 : index
      %c0_74 = arith.constant 0 : index
      %155 = vector.load %arg15[%c0_73, %c1, %c0_74] : memref<1x8x128xf32, #tpu.memory_space<vmem>>, vector<1x1x128xf32>
      %156 = vector.shape_cast %155 : vector<1x1x128xf32> to vector<1x128xf32>
      %157 = vector.shape_cast %154 : vector<1x128xf32> to vector<1x1x128xf32>
      tpu.vector_store %arg15[%c0_73, %c1, %c0_74], %157 {strides = array<i32>} : memref<1x8x128xf32, #tpu.memory_space<vmem>>, vector<1x1x128xf32>,
      %158 = vector.shape_cast %128 : vector<1x1xf32> to vector<1x1xf32>
      %159 = vector.broadcast %158 : vector<1x1xf32> to vector<1x128xf32>
      %c0_75 = arith.constant 0 : index
      %c2 = arith.constant 2 : index
      %c0_76 = arith.constant 0 : index
      %160 = vector.load %arg15[%c0_75, %c2, %c0_76] : memref<1x8x128xf32, #tpu.memory_space<vmem>>, vector<1x1x128xf32>
      %161 = vector.shape_cast %160 : vector<1x1x128xf32> to vector<1x128xf32>
      %162 = vector.shape_cast %159 : vector<1x128xf32> to vector<1x1x128xf32>
      tpu.vector_store %arg15[%c0_75, %c2, %c0_76], %162 {strides = array<i32>} : memref<1x8x128xf32, #tpu.memory_space<vmem>>, vector<1x1x128xf32>,
      %cst_77 = arith.constant 0.000000e+00 : f32
      %163 = vector.broadcast %cst_77 : f32 to vector<2x128xf32>
      %c0_78 = arith.constant 0 : index
      %c3_79 = arith.constant 3 : index
      %c0_80 = arith.constant 0 : index
      %164 = vector.load %arg15[%c0_78, %c3_79, %c0_80] : memref<1x8x128xf32, #tpu.memory_space<vmem>>, vector<1x2x128xf32>
      %165 = vector.shape_cast %164 : vector<1x2x128xf32> to vector<2x128xf32>
      %166 = vector.shape_cast %163 : vector<2x128xf32> to vector<1x2x128xf32>
      tpu.vector_store %arg15[%c0_78, %c3_79, %c0_80], %166 {strides = array<i32>} : memref<1x8x128xf32, #tpu.memory_space<vmem>>, vector<1x2x128xf32>,
      %167 = vector.shape_cast %142 : vector<1x1xf32> to vector<1x1xf32>
      %168 = vector.broadcast %167 : vector<1x1xf32> to vector<1x128xf32>
      %c0_81 = arith.constant 0 : index
      %c5 = arith.constant 5 : index
      %c0_82 = arith.constant 0 : index
      %169 = vector.load %arg15[%c0_81, %c5, %c0_82] : memref<1x8x128xf32, #tpu.memory_space<vmem>>, vector<1x1x128xf32>
      %170 = vector.shape_cast %169 : vector<1x1x128xf32> to vector<1x128xf32>
      %171 = vector.shape_cast %168 : vector<1x128xf32> to vector<1x1x128xf32>
      tpu.vector_store %arg15[%c0_81, %c5, %c0_82], %171 {strides = array<i32>} : memref<1x8x128xf32, #tpu.memory_space<vmem>>, vector<1x1x128xf32>,
      %172 = vector.shape_cast %147 : vector<1x1xf32> to vector<1x1xf32>
      %173 = vector.broadcast %172 : vector<1x1xf32> to vector<1x128xf32>
      %c0_83 = arith.constant 0 : index
      %c6 = arith.constant 6 : index
      %c0_84 = arith.constant 0 : index
      %174 = vector.load %arg15[%c0_83, %c6, %c0_84] : memref<1x8x128xf32, #tpu.memory_space<vmem>>, vector<1x1x128xf32>
      %175 = vector.shape_cast %174 : vector<1x1x128xf32> to vector<1x128xf32>
      %176 = vector.shape_cast %173 : vector<1x128xf32> to vector<1x1x128xf32>
      tpu.vector_store %arg15[%c0_83, %c6, %c0_84], %176 {strides = array<i32>} : memref<1x8x128xf32, #tpu.memory_space<vmem>>, vector<1x1x128xf32>,
      %cst_85 = arith.constant 0.000000e+00 : f32
      %177 = vector.broadcast %cst_85 : f32 to vector<1x128xf32>
      %c0_86 = arith.constant 0 : index
      %c7 = arith.constant 7 : index
      %c0_87 = arith.constant 0 : index
      %178 = vector.load %arg15[%c0_86, %c7, %c0_87] : memref<1x8x128xf32, #tpu.memory_space<vmem>>, vector<1x1x128xf32>
      %179 = vector.shape_cast %178 : vector<1x1x128xf32> to vector<1x128xf32>
      %180 = vector.shape_cast %177 : vector<1x128xf32> to vector<1x1x128xf32>
      tpu.vector_store %arg15[%c0_86, %c7, %c0_87], %180 {strides = array<i32>} : memref<1x8x128xf32, #tpu.memory_space<vmem>>, vector<1x1x128xf32>,
    } else {
    }
    %c0 = arith.constant 0 : index
    %c0_1 = arith.constant 0 : index
    %c0_2 = arith.constant 0 : index
    %3 = vector.load %arg5[%c0, %c0_1, %c0_2] : memref<1x16x8xf32, #tpu.memory_space<vmem>>, vector<1x16x8xf32>
    %4 = vector.shape_cast %3 : vector<1x16x8xf32> to vector<16x8xf32>
    %c0_3 = arith.constant 0 : index
    %c0_4 = arith.constant 0 : index
    %c0_5 = arith.constant 0 : index
    %5 = vector.load %arg6[%c0_3, %c0_4, %c0_5] : memref<1x16x8xf32, #tpu.memory_space<vmem>>, vector<1x16x8xf32>
    %6 = vector.shape_cast %5 : vector<1x16x8xf32> to vector<16x8xf32>
    %cst = arith.constant dense<0.000000e+00> : vector<16x16xf32>
    %7 = tpu.matmul %4, %6, %cst {dimension_numbers = #tpu.dot_dimension_numbers<[1], [1], [0], [0], [0, 0, 1, 0], [], []>} : vector<16x8xf32>, vector<16x8xf32>, vector<16x16xf32> -> vector<16x16xf32>
    %c0_6 = arith.constant 0 : index
    %c0_7 = arith.constant 0 : index
    %c0_8 = arith.constant 0 : index
    %8 = vector.load %arg7[%c0_6, %c0_7, %c0_8] : memref<1x16x1xf32, #tpu.memory_space<vmem>>, vector<1x16x1xf32>
    %9 = vector.shape_cast %8 : vector<1x16x1xf32> to vector<16x1xf32>
    %c0_9 = arith.constant 0 : index
    %c0_10 = arith.constant 0 : index
    %c0_11 = arith.constant 0 : index
    %10 = vector.load %arg8[%c0_9, %c0_10, %c0_11] : memref<1x1x16xf32, #tpu.memory_space<vmem>>, vector<1x1x16xf32>
    %11 = vector.shape_cast %10 : vector<1x1x16xf32> to vector<1x16xf32>
    %12 = vector.broadcast %9 : vector<16x1xf32> to vector<16x16xf32>
    %13 = vector.broadcast %11 : vector<1x16xf32> to vector<16x16xf32>
    %14 = arith.addf %12, %13 : vector<16x16xf32>
    %cst_12 = arith.constant 2.000000e+00 : f32
    %15 = vector.broadcast %cst_12 : f32 to vector<16x16xf32>
    %16 = arith.mulf %15, %7 : vector<16x16xf32>
    %17 = arith.subf %14, %16 : vector<16x16xf32>
    %cst_13 = arith.constant 0.000000e+00 : f32
    %18 = vector.broadcast %cst_13 : f32 to vector<16x16xf32>
    %19 = arith.maximumf %17, %18 : vector<16x16xf32>
    %20 = math.sqrt %19 : vector<16x16xf32>
    %c0_14 = arith.constant 0 : index
    %c0_15 = arith.constant 0 : index
    %c0_16 = arith.constant 0 : index
    %21 = vector.load %arg9[%c0_14, %c0_15, %c0_16] : memref<1x16x1xi32, #tpu.memory_space<vmem>>, vector<1x16x1xi32>
    %22 = vector.shape_cast %21 : vector<1x16x1xi32> to vector<16x1xi32>
    %c0_17 = arith.constant 0 : index
    %c0_18 = arith.constant 0 : index
    %c0_19 = arith.constant 0 : index
    %23 = vector.load %arg10[%c0_17, %c0_18, %c0_19] : memref<1x1x16xi32, #tpu.memory_space<vmem>>, vector<1x1x16xi32>
    %24 = vector.shape_cast %23 : vector<1x1x16xi32> to vector<1x16xi32>
    %25 = vector.broadcast %22 : vector<16x1xi32> to vector<16x16xi32>
    %26 = vector.broadcast %24 : vector<1x16xi32> to vector<16x16xi32>
    %27 = arith.cmpi eq, %25, %26 : vector<16x16xi32>
    %cst_20 = arith.constant 2.000000e-01 : f32
    %28 = vector.broadcast %cst_20 : f32 to vector<16x16xf32>
    %29 = arith.cmpf ogt, %20, %28 : vector<16x16xf32>
    %30 = arith.andi %27, %29 : vector<16x16xi1>
    %cst_21 = arith.constant 2.000000e+01 : f32
    %31 = vector.broadcast %cst_21 : f32 to vector<16x16xf32>
    %32 = arith.cmpf olt, %20, %31 : vector<16x16xf32>
    %33 = arith.andi %30, %32 : vector<16x16xi1>
    %c0_22 = arith.constant 0 : index
    %c0_23 = arith.constant 0 : index
    %c0_24 = arith.constant 0 : index
    %34 = vector.load %arg11[%c0_22, %c0_23, %c0_24] : memref<1x16x16xf32, #tpu.memory_space<vmem>>, vector<1x16x16xf32>
    %35 = vector.shape_cast %34 : vector<1x16x16xf32> to vector<16x16xf32>
    %36 = arith.subf %20, %35 : vector<16x16xf32>
    %37 = arith.mulf %36, %36 : vector<16x16xf32>
    %cst_25 = arith.constant 0.000000e+00 : f32
    %38 = vector.broadcast %cst_25 : f32 to vector<16x16xf32>
    %39 = arith.select %33, %37, %38 : vector<16x16xi1>, vector<16x16xf32>
    %40 = vector.shape_cast %39 : vector<16x16xf32> to vector<1x16x16xf32>
    %cst_26 = arith.constant dense<0.000000e+00> : vector<1xf32>
    %41 = vector.multi_reduction <add>, %40, %cst_26 [1, 2] : vector<1x16x16xf32> to vector<1xf32>
    %42 = vector.shape_cast %41 : vector<1xf32> to vector<1x1x1xf32>
    %43 = vector.extract %42[0, 0, 0] : f32 from vector<1x1x1xf32>
    %44 = vector.broadcast %43 : f32 to vector<1x1xf32>
    %45 = arith.extui %33 : vector<16x16xi1> to vector<16x16xi32>
    %46 = arith.sitofp %45 : vector<16x16xi32> to vector<16x16xf32>
    %47 = vector.shape_cast %46 : vector<16x16xf32> to vector<1x16x16xf32>
    %cst_27 = arith.constant dense<0.000000e+00> : vector<1xf32>
    %48 = vector.multi_reduction <add>, %47, %cst_27 [1, 2] : vector<1x16x16xf32> to vector<1xf32>
    %49 = vector.shape_cast %48 : vector<1xf32> to vector<1x1x1xf32>
    %50 = vector.extract %49[0, 0, 0] : f32 from vector<1x1x1xf32>
    %51 = vector.broadcast %50 : f32 to vector<1x1xf32>
    %c0_28 = arith.constant 0 : index
    %c3 = arith.constant 3 : index
    %c0_29 = arith.constant 0 : index
    %52 = vector.load %arg15[%c0_28, %c3, %c0_29] : memref<1x8x128xf32, #tpu.memory_space<vmem>>, vector<1x1x128xf32>
    %53 = vector.shape_cast %52 : vector<1x1x128xf32> to vector<1x128xf32>
    %54 = vector.shape_cast %44 : vector<1x1xf32> to vector<1x1xf32>
    %55 = vector.broadcast %54 : vector<1x1xf32> to vector<1x128xf32>
    %56 = arith.addf %53, %55 : vector<1x128xf32>
    %c0_30 = arith.constant 0 : index
    %c3_31 = arith.constant 3 : index
    %c0_32 = arith.constant 0 : index
    %57 = vector.load %arg15[%c0_30, %c3_31, %c0_32] : memref<1x8x128xf32, #tpu.memory_space<vmem>>, vector<1x1x128xf32>
    %58 = vector.shape_cast %57 : vector<1x1x128xf32> to vector<1x128xf32>
    %59 = vector.shape_cast %56 : vector<1x128xf32> to vector<1x1x128xf32>
    tpu.vector_store %arg15[%c0_30, %c3_31, %c0_32], %59 {strides = array<i32>} : memref<1x8x128xf32, #tpu.memory_space<vmem>>, vector<1x1x128xf32>,
    %c0_33 = arith.constant 0 : index
    %c4 = arith.constant 4 : index
    %c0_34 = arith.constant 0 : index
    %60 = vector.load %arg15[%c0_33, %c4, %c0_34] : memref<1x8x128xf32, #tpu.memory_space<vmem>>, vector<1x1x128xf32>
    %61 = vector.shape_cast %60 : vector<1x1x128xf32> to vector<1x128xf32>
    %62 = vector.shape_cast %51 : vector<1x1xf32> to vector<1x1xf32>
    %63 = vector.broadcast %62 : vector<1x1xf32> to vector<1x128xf32>
    %64 = arith.addf %61, %63 : vector<1x128xf32>
    %c0_35 = arith.constant 0 : index
    %c4_36 = arith.constant 4 : index
    %c0_37 = arith.constant 0 : index
    %65 = vector.load %arg15[%c0_35, %c4_36, %c0_37] : memref<1x8x128xf32, #tpu.memory_space<vmem>>, vector<1x1x128xf32>
    %66 = vector.shape_cast %65 : vector<1x1x128xf32> to vector<1x128xf32>
    %67 = vector.shape_cast %64 : vector<1x128xf32> to vector<1x1x128xf32>
    tpu.vector_store %arg15[%c0_35, %c4_36, %c0_37], %67 {strides = array<i32>} : memref<1x8x128xf32, #tpu.memory_space<vmem>>, vector<1x1x128xf32>,
    return
  }
  func.func @transform_0(%arg0: i32, %arg1: i32) -> (i32, i32, i32) {
    %c0_i32 = arith.constant 0 : i32
    %c0_i32_0 = arith.constant 0 : i32
    %c0_i32_1 = arith.constant 0 : i32
    return %arg0, %c0_i32, %c0_i32_0 : i32, i32, i32
  }
  func.func @transform_1(%arg0: i32, %arg1: i32) -> (i32, i32, i32) {
    %c0_i32 = arith.constant 0 : i32
    %c0_i32_0 = arith.constant 0 : i32
    %c0_i32_1 = arith.constant 0 : i32
    return %arg0, %c0_i32, %c0_i32_0 : i32, i32, i32
  }
  func.func @transform_2(%arg0: i32, %arg1: i32) -> (i32, i32, i32) {
    %c0_i32 = arith.constant 0 : i32
    %c0_i32_0 = arith.constant 0 : i32
    %c0_i32_1 = arith.constant 0 : i32
    return %arg0, %c0_i32, %c0_i32_0 : i32, i32, i32
  }
  func.func @transform_3(%arg0: i32, %arg1: i32) -> (i32, i32, i32) {
    %c0_i32 = arith.constant 0 : i32
    %c0_i32_0 = arith.constant 0 : i32
    %c0_i32_1 = arith.constant 0 : i32
    return %arg0, %c0_i32, %c0_i32_0 : i32, i32, i32
  }
  func.func @transform_4(%arg0: i32, %arg1: i32) -> (i32, i32, i32) {
    %c0_i32 = arith.constant 0 : i32
    %c0_i32_0 = arith.constant 0 : i32
    return %arg0, %arg1, %c0_i32 : i32, i32, i32
  }
  func.func @transform_5(%arg0: i32, %arg1: i32) -> (i32, i32, i32) {
    %c0_i32 = arith.constant 0 : i32
    %c0_i32_0 = arith.constant 0 : i32
    %c0_i32_1 = arith.constant 0 : i32
    return %arg0, %c0_i32, %c0_i32_0 : i32, i32, i32
  }
  func.func @transform_6(%arg0: i32, %arg1: i32) -> (i32, i32, i32) {
    %c0_i32 = arith.constant 0 : i32
    %c0_i32_0 = arith.constant 0 : i32
    return %arg0, %c0_i32, %arg1 : i32, i32, i32
  }
  func.func @transform_7(%arg0: i32, %arg1: i32) -> (i32, i32, i32) {
    %c0_i32 = arith.constant 0 : i32
    %c0_i32_0 = arith.constant 0 : i32
    %c0_i32_1 = arith.constant 0 : i32
    return %arg0, %c0_i32, %c0_i32_0 : i32, i32, i32
  }
  func.func @transform_8(%arg0: i32, %arg1: i32) -> (i32, i32, i32) {
    %c0_i32 = arith.constant 0 : i32
    %c0_i32_0 = arith.constant 0 : i32
    return %arg0, %c0_i32, %arg1 : i32, i32, i32
  }
  func.func @transform_9(%arg0: i32, %arg1: i32) -> (i32, i32, i32) {
    %c0_i32 = arith.constant 0 : i32
    %c0_i32_0 = arith.constant 0 : i32
    return %arg0, %c0_i32, %arg1 : i32, i32, i32
  }
  func.func @transform_10(%arg0: i32, %arg1: i32) -> (i32, i32, i32) {
    %c0_i32 = arith.constant 0 : i32
    %c0_i32_0 = arith.constant 0 : i32
    %c0_i32_1 = arith.constant 0 : i32
    return %arg0, %c0_i32, %c0_i32_0 : i32, i32, i32
  }
  func.func @transform_11(%arg0: i32, %arg1: i32) -> (i32, i32, i32) {
    %c0_i32 = arith.constant 0 : i32
    %c0_i32_0 = arith.constant 0 : i32
    %c0_i32_1 = arith.constant 0 : i32
    return %arg0, %c0_i32, %c0_i32_0 : i32, i32, i32
  }
  func.func @transform_12(%arg0: i32, %arg1: i32) -> (i32, i32, i32) {
    %c0_i32 = arith.constant 0 : i32
    %c0_i32_0 = arith.constant 0 : i32
    %c0_i32_1 = arith.constant 0 : i32
    return %arg0, %c0_i32, %c0_i32_0 : i32, i32, i32
  }
  func.func @transform_13(%arg0: i32, %arg1: i32) -> (i32, i32, i32) {
    %c0_i32 = arith.constant 0 : i32
    %c0_i32_0 = arith.constant 0 : i32
    %c0_i32_1 = arith.constant 0 : i32
    return %arg0, %c0_i32, %c0_i32_0 : i32, i32, i32
  }
}

</mosaic_0001>

<llo_original>
// kernel: tpu_custom_call.1
$region0: #{tpu_custom_call.1}
  #allocation0 [shape = 'u32[]', space=smem, size = 0x4, offset = 0x4, fixed_abs, tag = 'smem constant byte address 0x4 - core index']
  #allocation1 [shape = 'u32[144,128]{1,0:T(1,128)}', space=vmem, size = 0x12000, scoped, tag = 'internal scratch']
  %s0 = inlined_call_operand.vmem [shape: s32[2,16,1], index: 0, kind: input, shape index: {}]
  %s1 = inlined_call_operand.vmem [shape: f32[2,16,1], index: 1, kind: input, shape index: {}]
  %s2 = inlined_call_operand.vmem [shape: f32[2,16,32], index: 2, kind: input, shape index: {}]
  %s3 = inlined_call_operand.vmem [shape: f32[2,16,8], index: 3, kind: input, shape index: {}]
  %s4 = inlined_call_operand.vmem [shape: f32[2,16,8], index: 4, kind: input, shape index: {}]
  %s5 = inlined_call_operand.vmem [shape: f32[2,16,1], index: 5, kind: input, shape index: {}]
  %s6 = inlined_call_operand.vmem [shape: f32[2,1,16], index: 6, kind: input, shape index: {}]
  %s7 = inlined_call_operand.vmem [shape: s32[2,16,1], index: 7, kind: input, shape index: {}]
  %s8 = inlined_call_operand.vmem [shape: s32[2,1,16], index: 8, kind: input, shape index: {}]
  %s9 = inlined_call_operand.vmem [shape: f32[2,16,16], index: 9, kind: input, shape index: {}]
  %s10 = inlined_call_operand.vmem [shape: f32[2,16,3], index: 10, kind: input, shape index: {}]
  %s11 = inlined_call_operand.vmem [shape: f32[2,16,3], index: 11, kind: input, shape index: {}]
  %s12 = inlined_call_operand.vmem [shape: f32[2,16,3], index: 12, kind: input, shape index: {}]
  %s13 = inlined_call_operand.hbm [shape: f32[2,8,128], index: 13, kind: output, shape index: {}]
  %s14 = sld [smem:[#allocation0]]
  $region89: #{tpu_custom_call.1} parent=0
    _
  %s16 = ssub.s32 1, %s14
  %s17 = scalar_select 0, %s16, %s14
  $region1: #{tpu_custom_call.1} parent=0
    #allocation2 [shape = 'u8[8192]{0}', space=vmem, size = 0x2000, scoped, tag = 'output window, operand 0']
    #allocation3 [shape = 's32[2]{0}', space=sflag, size = 0x8, scoped, tag = 'scoped memory for tpu_custom_call.1']
    %18 = vsyncpa [#allocation3], 0
    %s19 = scalar_lea.sflag [#allocation3], 1
    %20 = vsyncpa %s19, 0
    loop: start=0, step=1, limit=4
    $region2: #{tpu_custom_call.1} parent=1 // loop_pre_header
      _
    $region3: #{tpu_custom_call.1} parent=1 // loop_header
      %s22 = sphi 0, %s26
      %p23 = scmp.ge.s32.totalorder %s22, 4
      %s29 = sphi 0, %s41
      %s30 = sphi 0, %s37
      %s31 = sphi 0, %s29
      %s32 = sphi 0, %s30
      %s33 = sphi 0, %s31
      %s34 = sphi 0, %s32
      %s44 = sphi 0, %s46
      %s47 = sphi 0, %s44
      %s48 = sphi 0, %s47
      %s64 = sphi 0, %s48
      %s70 = sphi 0, %s72
      %s73 = sphi 0, %s70
      %s74 = sphi 0, %s73
      %s90 = sphi 0, %s74
      %s96 = sphi 0, %s98
      %s99 = sphi 0, %s96
      %s100 = sphi 0, %s99
      %s116 = sphi 0, %s100
      %s122 = sphi 0, %s124
      %s125 = sphi 0, %s122
      %s126 = sphi 0, %s125
      %s142 = sphi 0, %s126
      %s150 = sphi 0, %s152
      %s153 = sphi 0, %s150
      %s154 = sphi 0, %s153
      %s170 = sphi 0, %s154
      %s176 = sphi 0, %s178
      %s179 = sphi 0, %s176
      %s180 = sphi 0, %s179
      %s196 = sphi 0, %s180
      %s204 = sphi 0, %s206
      %s207 = sphi 0, %s204
      %s208 = sphi 0, %s207
      %s224 = sphi 0, %s208
      %s230 = sphi 0, %s232
      %s233 = sphi 0, %s230
      %s234 = sphi 0, %s233
      %s250 = sphi 0, %s234
      %s258 = sphi 0, %s260
      %s261 = sphi 0, %s258
      %s262 = sphi 0, %s261
      %s278 = sphi 0, %s262
      %s286 = sphi 0, %s288
      %s289 = sphi 0, %s286
      %s290 = sphi 0, %s289
      %s306 = sphi 0, %s290
      %s312 = sphi 0, %s314
      %s315 = sphi 0, %s312
      %s316 = sphi 0, %s315
      %s332 = sphi 0, %s316
      %s338 = sphi 0, %s340
      %s341 = sphi 0, %s338
      %s342 = sphi 0, %s341
      %s358 = sphi 0, %s342
      %s364 = sphi 0, %s366
      %s367 = sphi 0, %s364
      %s368 = sphi 0, %s367
      %s384 = sphi 0, %s368
      %s390 = sphi 0, %s392
      %s393 = sphi 0, %s390
      %s394 = sphi 0, %s393
      %s410 = sphi 0, %s394
    $region4: #{tpu_custom_call.1} parent=1 // loop_header_branch
      %25 = sbr.rel (%p23) target = $region8
    $region5: #{tpu_custom_call.1} parent=1 // loop_body
      %s27 = ssub.s32 %s22, 1
      %s28 = ssub.s32 %s22, 2
      %s35 = sadd.s32 1, %s30
      %p36 = scmp.ge.s32.totalorder %s35, 1
      %s37 = scalar_select %p36, 0, %s35
      %s38 = sadd.s32 1, %s29
      %s39 = scalar_select %p36, %s38, %s29
      %p40 = scmp.ge.s32.totalorder %s39, 2
      %s41 = scalar_select %p40, 0, %s39
      %s42 = ssub.s32 %s29, %s41
      %p43 = scmp.eq.s32.totalorder %s42, 0
      %s45 = sadd.s32 %s44, 1
      %s46 = scalar_select %p43, %s44, %s45
      %p49 = pneg %p43
      %p50 = scmp.eq.s32.totalorder %s22, 1
      %p51 = por %p49, %p50
      %p52 = scmp.ne.s32.totalorder %s44, %s47
      %p53 = scmp.eq.s32.totalorder %s22, 0
      %p54 = por %p52, %p53
      %p55 = scmp.ne.s32.totalorder %s44, %s47
      %p56 = scmp.eq.s32.totalorder %s27, 1
      %p57 = por %p55, %p56
      %p58 = scmp.ne.s32.totalorder %s47, %s48
      %p59 = scmp.eq.s32.totalorder %s27, 0
      %p60 = por %p58, %p59
      %p61 = scmp.ne.s32.totalorder %s47, %s48
      %p62 = scmp.eq.s32.totalorder %s28, 1
      %p63 = por %p61, %p62
      %p65 = scmp.ne.s32.totalorder %s48, %s64
      %p66 = scmp.eq.s32.totalorder %s28, 0
      %p67 = por %p65, %p66
      %s68 = ssub.s32 %s29, %s41
      %p69 = scmp.eq.s32.totalorder %s68, 0
      %s71 = sadd.s32 %s70, 1
      %s72 = scalar_select %p69, %s70, %s71
      %p75 = pneg %p69
      %p76 = scmp.eq.s32.totalorder %s22, 1
      %p77 = por %p75, %p76
      %p78 = scmp.ne.s32.totalorder %s70, %s73
      %p79 = scmp.eq.s32.totalorder %s22, 0
      %p80 = por %p78, %p79
      %p81 = scmp.ne.s32.totalorder %s70, %s73
      %p82 = scmp.eq.s32.totalorder %s27, 1
      %p83 = por %p81, %p82
      %p84 = scmp.ne.s32.totalorder %s73, %s74
      %p85 = scmp.eq.s32.totalorder %s27, 0
      %p86 = por %p84, %p85
      %p87 = scmp.ne.s32.totalorder %s73, %s74
      %p88 = scmp.eq.s32.totalorder %s28, 1
      %p89 = por %p87, %p88
      %p91 = scmp.ne.s32.totalorder %s74, %s90
      %p92 = scmp.eq.s32.totalorder %s28, 0
      %p93 = por %p91, %p92
      %s94 = ssub.s32 %s29, %s41
      %p95 = scmp.eq.s32.totalorder %s94, 0
      %s97 = sadd.s32 %s96, 1
      %s98 = scalar_select %p95, %s96, %s97
      %p101 = pneg %p95
      %p102 = scmp.eq.s32.totalorder %s22, 1
      %p103 = por %p101, %p102
      %p104 = scmp.ne.s32.totalorder %s96, %s99
      %p105 = scmp.eq.s32.totalorder %s22, 0
      %p106 = por %p104, %p105
      %p107 = scmp.ne.s32.totalorder %s96, %s99
      %p108 = scmp.eq.s32.totalorder %s27, 1
      %p109 = por %p107, %p108
      %p110 = scmp.ne.s32.totalorder %s99, %s100
      %p111 = scmp.eq.s32.totalorder %s27, 0
      %p112 = por %p110, %p111
      %p113 = scmp.ne.s32.totalorder %s99, %s100
      %p114 = scmp.eq.s32.totalorder %s28, 1
      %p115 = por %p113, %p114
      %p117 = scmp.ne.s32.totalorder %s100, %s116
      %p118 = scmp.eq.s32.totalorder %s28, 0
      %p119 = por %p117, %p118
      %s120 = ssub.s32 %s29, %s41
      %p121 = scmp.eq.s32.totalorder %s120, 0
      %s123 = sadd.s32 %s122, 1
      %s124 = scalar_select %p121, %s122, %s123
      %p127 = pneg %p121
      %p128 = scmp.eq.s32.totalorder %s22, 1
      %p129 = por %p127, %p128
      %p130 = scmp.ne.s32.totalorder %s122, %s125
      %p131 = scmp.eq.s32.totalorder %s22, 0
      %p132 = por %p130, %p131
      %p133 = scmp.ne.s32.totalorder %s122, %s125
      %p134 = scmp.eq.s32.totalorder %s27, 1
      %p135 = por %p133, %p134
      %p136 = scmp.ne.s32.totalorder %s125, %s126
      %p137 = scmp.eq.s32.totalorder %s27, 0
      %p138 = por %p136, %p137
      %p139 = scmp.ne.s32.totalorder %s125, %s126
      %p140 = scmp.eq.s32.totalorder %s28, 1
      %p141 = por %p139, %p140
      %p143 = scmp.ne.s32.totalorder %s126, %s142
      %p144 = scmp.eq.s32.totalorder %s28, 0
      %p145 = por %p143, %p144
      %s146 = ssub.s32 %s29, %s41
      %s147 = ssub.s32 %s30, %s37
      %s148 = sor.u32 %s146, %s147
      %p149 = scmp.eq.s32.totalorder %s148, 0
      %s151 = sadd.s32 %s150, 1
      %s152 = scalar_select %p149, %s150, %s151
      %p155 = pneg %p149
      %p156 = scmp.eq.s32.totalorder %s22, 1
      %p157 = por %p155, %p156
      %p158 = scmp.ne.s32.totalorder %s150, %s153
      %p159 = scmp.eq.s32.totalorder %s22, 0
      %p160 = por %p158, %p159
      %p161 = scmp.ne.s32.totalorder %s150, %s153
      %p162 = scmp.eq.s32.totalorder %s27, 1
      %p163 = por %p161, %p162
      %p164 = scmp.ne.s32.totalorder %s153, %s154
      %p165 = scmp.eq.s32.totalorder %s27, 0
      %p166 = por %p164, %p165
      %p167 = scmp.ne.s32.totalorder %s153, %s154
      %p168 = scmp.eq.s32.totalorder %s28, 1
      %p169 = por %p167, %p168
      %p171 = scmp.ne.s32.totalorder %s154, %s170
      %p172 = scmp.eq.s32.totalorder %s28, 0
      %p173 = por %p171, %p172
      %s174 = ssub.s32 %s29, %s41
      %p175 = scmp.eq.s32.totalorder %s174, 0
      %s177 = sadd.s32 %s176, 1
      %s178 = scalar_select %p175, %s176, %s177
      %p181 = pneg %p175
      %p182 = scmp.eq.s32.totalorder %s22, 1
      %p183 = por %p181, %p182
      %p184 = scmp.ne.s32.totalorder %s176, %s179
      %p185 = scmp.eq.s32.totalorder %s22, 0
      %p186 = por %p184, %p185
      %p187 = scmp.ne.s32.totalorder %s176, %s179
      %p188 = scmp.eq.s32.totalorder %s27, 1
      %p189 = por %p187, %p188
      %p190 = scmp.ne.s32.totalorder %s179, %s180
      %p191 = scmp.eq.s32.totalorder %s27, 0
      %p192 = por %p190, %p191
      %p193 = scmp.ne.s32.totalorder %s179, %s180
      %p194 = scmp.eq.s32.totalorder %s28, 1
      %p195 = por %p193, %p194
      %p197 = scmp.ne.s32.totalorder %s180, %s196
      %p198 = scmp.eq.s32.totalorder %s28, 0
      %p199 = por %p197, %p198
      %s200 = ssub.s32 %s29, %s41
      %s201 = ssub.s32 %s30, %s37
      %s202 = sor.u32 %s200, %s201
      %p203 = scmp.eq.s32.totalorder %s202, 0
      %s205 = sadd.s32 %s204, 1
      %s206 = scalar_select %p203, %s204, %s205
      %p209 = pneg %p203
      %p210 = scmp.eq.s32.totalorder %s22, 1
      %p211 = por %p209, %p210
      %p212 = scmp.ne.s32.totalorder %s204, %s207
      %p213 = scmp.eq.s32.totalorder %s22, 0
      %p214 = por %p212, %p213
      %p215 = scmp.ne.s32.totalorder %s204, %s207
      %p216 = scmp.eq.s32.totalorder %s27, 1
      %p217 = por %p215, %p216
      %p218 = scmp.ne.s32.totalorder %s207, %s208
      %p219 = scmp.eq.s32.totalorder %s27, 0
      %p220 = por %p218, %p219
      %p221 = scmp.ne.s32.totalorder %s207, %s208
      %p222 = scmp.eq.s32.totalorder %s28, 1
      %p223 = por %p221, %p222
      %p225 = scmp.ne.s32.totalorder %s208, %s224
      %p226 = scmp.eq.s32.totalorder %s28, 0
      %p227 = por %p225, %p226
      %s228 = ssub.s32 %s29, %s41
      %p229 = scmp.eq.s32.totalorder %s228, 0
      %s231 = sadd.s32 %s230, 1
      %s232 = scalar_select %p229, %s230, %s231
      %p235 = pneg %p229
      %p236 = scmp.eq.s32.totalorder %s22, 1
      %p237 = por %p235, %p236
      %p238 = scmp.ne.s32.totalorder %s230, %s233
      %p239 = scmp.eq.s32.totalorder %s22, 0
      %p240 = por %p238, %p239
      %p241 = scmp.ne.s32.totalorder %s230, %s233
      %p242 = scmp.eq.s32.totalorder %s27, 1
      %p243 = por %p241, %p242
      %p244 = scmp.ne.s32.totalorder %s233, %s234
      %p245 = scmp.eq.s32.totalorder %s27, 0
      %p246 = por %p244, %p245
      %p247 = scmp.ne.s32.totalorder %s233, %s234
      %p248 = scmp.eq.s32.totalorder %s28, 1
      %p249 = por %p247, %p248
      %p251 = scmp.ne.s32.totalorder %s234, %s250
      %p252 = scmp.eq.s32.totalorder %s28, 0
      %p253 = por %p251, %p252
      %s254 = ssub.s32 %s29, %s41
      %s255 = ssub.s32 %s30, %s37
      %s256 = sor.u32 %s254, %s255
      %p257 = scmp.eq.s32.totalorder %s256, 0
      %s259 = sadd.s32 %s258, 1
      %s260 = scalar_select %p257, %s258, %s259
      %p263 = pneg %p257
      %p264 = scmp.eq.s32.totalorder %s22, 1
      %p265 = por %p263, %p264
      %p266 = scmp.ne.s32.totalorder %s258, %s261
      %p267 = scmp.eq.s32.totalorder %s22, 0
      %p268 = por %p266, %p267
      %p269 = scmp.ne.s32.totalorder %s258, %s261
      %p270 = scmp.eq.s32.totalorder %s27, 1
      %p271 = por %p269, %p270
      %p272 = scmp.ne.s32.totalorder %s261, %s262
      %p273 = scmp.eq.s32.totalorder %s27, 0
      %p274 = por %p272, %p273
      %p275 = scmp.ne.s32.totalorder %s261, %s262
      %p276 = scmp.eq.s32.totalorder %s28, 1
      %p277 = por %p275, %p276
      %p279 = scmp.ne.s32.totalorder %s262, %s278
      %p280 = scmp.eq.s32.totalorder %s28, 0
      %p281 = por %p279, %p280
      %s282 = ssub.s32 %s29, %s41
      %s283 = ssub.s32 %s30, %s37
      %s284 = sor.u32 %s282, %s283
      %p285 = scmp.eq.s32.totalorder %s284, 0
      %s287 = sadd.s32 %s286, 1
      %s288 = scalar_select %p285, %s286, %s287
      %p291 = pneg %p285
      %p292 = scmp.eq.s32.totalorder %s22, 1
      %p293 = por %p291, %p292
      %p294 = scmp.ne.s32.totalorder %s286, %s289
      %p295 = scmp.eq.s32.totalorder %s22, 0
      %p296 = por %p294, %p295
      %p297 = scmp.ne.s32.totalorder %s286, %s289
      %p298 = scmp.eq.s32.totalorder %s27, 1
      %p299 = por %p297, %p298
      %p300 = scmp.ne.s32.totalorder %s289, %s290
      %p301 = scmp.eq.s32.totalorder %s27, 0
      %p302 = por %p300, %p301
      %p303 = scmp.ne.s32.totalorder %s289, %s290
      %p304 = scmp.eq.s32.totalorder %s28, 1
      %p305 = por %p303, %p304
      %p307 = scmp.ne.s32.totalorder %s290, %s306
      %p308 = scmp.eq.s32.totalorder %s28, 0
      %p309 = por %p307, %p308
      %s310 = ssub.s32 %s29, %s41
      %p311 = scmp.eq.s32.totalorder %s310, 0
      %s313 = sadd.s32 %s312, 1
      %s314 = scalar_select %p311, %s312, %s313
      %p317 = pneg %p311
      %p318 = scmp.eq.s32.totalorder %s22, 1
      %p319 = por %p317, %p318
      %p320 = scmp.ne.s32.totalorder %s312, %s315
      %p321 = scmp.eq.s32.totalorder %s22, 0
      %p322 = por %p320, %p321
      %p323 = scmp.ne.s32.totalorder %s312, %s315
      %p324 = scmp.eq.s32.totalorder %s27, 1
      %p325 = por %p323, %p324
      %p326 = scmp.ne.s32.totalorder %s315, %s316
      %p327 = scmp.eq.s32.totalorder %s27, 0
      %p328 = por %p326, %p327
      %p329 = scmp.ne.s32.totalorder %s315, %s316
      %p330 = scmp.eq.s32.totalorder %s28, 1
      %p331 = por %p329, %p330
      %p333 = scmp.ne.s32.totalorder %s316, %s332
      %p334 = scmp.eq.s32.totalorder %s28, 0
      %p335 = por %p333, %p334
      %s336 = ssub.s32 %s29, %s41
      %p337 = scmp.eq.s32.totalorder %s336, 0
      %s339 = sadd.s32 %s338, 1
      %s340 = scalar_select %p337, %s338, %s339
      %p343 = pneg %p337
      %p344 = scmp.eq.s32.totalorder %s22, 1
      %p345 = por %p343, %p344
      %p346 = scmp.ne.s32.totalorder %s338, %s341
      %p347 = scmp.eq.s32.totalorder %s22, 0
      %p348 = por %p346, %p347
      %p349 = scmp.ne.s32.totalorder %s338, %s341
      %p350 = scmp.eq.s32.totalorder %s27, 1
      %p351 = por %p349, %p350
      %p352 = scmp.ne.s32.totalorder %s341, %s342
      %p353 = scmp.eq.s32.totalorder %s27, 0
      %p354 = por %p352, %p353
      %p355 = scmp.ne.s32.totalorder %s341, %s342
      %p356 = scmp.eq.s32.totalorder %s28, 1
      %p357 = por %p355, %p356
      %p359 = scmp.ne.s32.totalorder %s342, %s358
      %p360 = scmp.eq.s32.totalorder %s28, 0
      %p361 = por %p359, %p360
      %s362 = ssub.s32 %s29, %s41
      %p363 = scmp.eq.s32.totalorder %s362, 0
      %s365 = sadd.s32 %s364, 1
      %s366 = scalar_select %p363, %s364, %s365
      %p369 = pneg %p363
      %p370 = scmp.eq.s32.totalorder %s22, 1
      %p371 = por %p369, %p370
      %p372 = scmp.ne.s32.totalorder %s364, %s367
      %p373 = scmp.eq.s32.totalorder %s22, 0
      %p374 = por %p372, %p373
      %p375 = scmp.ne.s32.totalorder %s364, %s367
      %p376 = scmp.eq.s32.totalorder %s27, 1
      %p377 = por %p375, %p376
      %p378 = scmp.ne.s32.totalorder %s367, %s368
      %p379 = scmp.eq.s32.totalorder %s27, 0
      %p380 = por %p378, %p379
      %p381 = scmp.ne.s32.totalorder %s367, %s368
      %p382 = scmp.eq.s32.totalorder %s28, 1
      %p383 = por %p381, %p382
      %p385 = scmp.ne.s32.totalorder %s368, %s384
      %p386 = scmp.eq.s32.totalorder %s28, 0
      %p387 = por %p385, %p386
      %s388 = ssub.s32 %s29, %s41
      %p389 = scmp.eq.s32.totalorder %s388, 0
      %s391 = sadd.s32 %s390, 1
      %s392 = scalar_select %p389, %s390, %s391
      %p395 = pneg %p389
      %p396 = scmp.eq.s32.totalorder %s22, 1
      %p397 = por %p395, %p396
      %p398 = scmp.ne.s32.totalorder %s390, %s393
      %p399 = scmp.eq.s32.totalorder %s22, 0
      %p400 = por %p398, %p399
      %p401 = scmp.ne.s32.totalorder %s390, %s393
      %p402 = scmp.eq.s32.totalorder %s27, 1
      %p403 = por %p401, %p402
      %p404 = scmp.ne.s32.totalorder %s393, %s394
      %p405 = scmp.eq.s32.totalorder %s27, 0
      %p406 = por %p404, %p405
      %p407 = scmp.ne.s32.totalorder %s393, %s394
      %p408 = scmp.eq.s32.totalorder %s28, 1
      %p409 = por %p407, %p408
      %p411 = scmp.ne.s32.totalorder %s394, %s410
      %p412 = scmp.eq.s32.totalorder %s28, 0
      %p413 = por %p411, %p412
      %p414 = scmp.le.s32.totalorder 1, %s22
      %p415 = scmp.lt.s32.totalorder %s22, 3
      %p416 = pnand %p414, %p415
      %p417 = pneg %p416
      // Predicated region
      $region9: #{tpu_custom_call.1} parent=5 // pred_check
        _
      $region10: #{tpu_custom_call.1} parent=5 // pred_check_branch
        %419 = sbr.rel (%p416) target = $region12
      $region11: #{tpu_custom_call.1} parent=5 // pred_region
        %s420 = ssub.s32 %s22, 1
      $region12: #{tpu_custom_call.1} parent=5 // pred_fallthru
        _
      %p421 = scmp.lt.s32.totalorder %s22, 2
      // Predicated region
      $region13: #{tpu_custom_call.1} parent=5 // pred_check
        %p422 = pneg %p421
      $region14: #{tpu_custom_call.1} parent=5 // pred_check_branch
        %424 = sbr.rel (%p422) target = $region16
      $region15: #{tpu_custom_call.1} parent=5 // pred_region
        // Predicated region
        $region17: #{tpu_custom_call.1} parent=15 // pred_check
          %p425 = pneg %p54
        $region18: #{tpu_custom_call.1} parent=15 // pred_check_branch
          %427 = sbr.rel (%p425) target = $region20
        $region19: #{tpu_custom_call.1} parent=15 // pred_region
          %p428 = scmp.lt.s32.totalorder %s29, 1
          %s429 = scalar_select %p428, %s29, 1
          %s430 = smul.addr %s429, 2
          %s431 = smul.addr %s430, 8
          %s432 = scalar_lea.vmem %s0, %s431
        $region20: #{tpu_custom_call.1} parent=15 // pred_fallthru
          _
        // Predicated region
        $region21: #{tpu_custom_call.1} parent=15 // pred_check
          %p433 = pneg %p80
        $region22: #{tpu_custom_call.1} parent=15 // pred_check_branch
          %435 = sbr.rel (%p433) target = $region24
        $region23: #{tpu_custom_call.1} parent=15 // pred_region
          %p436 = scmp.lt.s32.totalorder %s29, 1
          %s437 = scalar_select %p436, %s29, 1
          %s438 = smul.addr %s437, 2
          %s439 = smul.addr %s438, 8
          %s440 = scalar_lea.vmem %s1, %s439
        $region24: #{tpu_custom_call.1} parent=15 // pred_fallthru
          _
        // Predicated region
        $region25: #{tpu_custom_call.1} parent=15 // pred_check
          %p441 = pneg %p106
        $region26: #{tpu_custom_call.1} parent=15 // pred_check_branch
          %443 = sbr.rel (%p441) target = $region28
        $region27: #{tpu_custom_call.1} parent=15 // pred_region
          %p444 = scmp.lt.s32.totalorder %s29, 1
          %s445 = scalar_select %p444, %s29, 1
          %s446 = smul.addr %s445, 2
          %s447 = smul.addr %s446, 8
          %s448 = scalar_lea.vmem %s2, %s447
        $region28: #{tpu_custom_call.1} parent=15 // pred_fallthru
          _
        // Predicated region
        $region29: #{tpu_custom_call.1} parent=15 // pred_check
          %p449 = pneg %p132
        $region30: #{tpu_custom_call.1} parent=15 // pred_check_branch
          %451 = sbr.rel (%p449) target = $region32
        $region31: #{tpu_custom_call.1} parent=15 // pred_region
          %p452 = scmp.lt.s32.totalorder %s29, 1
          %s453 = scalar_select %p452, %s29, 1
          %s454 = smul.addr %s453, 2
          %s455 = smul.addr %s454, 8
          %s456 = scalar_lea.vmem %s3, %s455
        $region32: #{tpu_custom_call.1} parent=15 // pred_fallthru
          _
        // Predicated region
        $region33: #{tpu_custom_call.1} parent=15 // pred_check
          %p457 = pneg %p160
        $region34: #{tpu_custom_call.1} parent=15 // pred_check_branch
          %459 = sbr.rel (%p457) target = $region36
        $region35: #{tpu_custom_call.1} parent=15 // pred_region
          %s460 = smul.u32 2, %s30
          %p461 = scmp.lt.s32.totalorder %s29, 1
          %s462 = scalar_select %p461, %s29, 1
          %p463 = scmp.lt.s32.totalorder %s460, 1
          %s464 = scalar_select %p463, %s460, 1
          %s465 = smul.addr %s462, 2
          %s466 = sadd.s32 %s464, %s465
          %s467 = smul.addr %s466, 8
          %s468 = scalar_lea.vmem %s4, %s467
          %s469 = smul.u32 2, %s30
        $region36: #{tpu_custom_call.1} parent=15 // pred_fallthru
          _
        // Predicated region
        $region37: #{tpu_custom_call.1} parent=15 // pred_check
          %p470 = pneg %p186
        $region38: #{tpu_custom_call.1} parent=15 // pred_check_branch
          %472 = sbr.rel (%p470) target = $region40
        $region39: #{tpu_custom_call.1} parent=15 // pred_region
          %p473 = scmp.lt.s32.totalorder %s29, 1
          %s474 = scalar_select %p473, %s29, 1
          %s475 = smul.addr %s474, 2
          %s476 = smul.addr %s475, 8
          %s477 = scalar_lea.vmem %s5, %s476
        $region40: #{tpu_custom_call.1} parent=15 // pred_fallthru
          _
        // Predicated region
        $region41: #{tpu_custom_call.1} parent=15 // pred_check
          %p478 = pneg %p214
        $region42: #{tpu_custom_call.1} parent=15 // pred_check_branch
          %480 = sbr.rel (%p478) target = $region44
        $region43: #{tpu_custom_call.1} parent=15 // pred_region
          %p481 = scmp.lt.s32.totalorder %s29, 1
          %s482 = scalar_select %p481, %s29, 1
          %p483 = scmp.lt.s32.totalorder %s30, 0
          %s484 = scalar_select %p483, %s30, 0
          %s485 = sadd.s32 %s484, %s482
          %s486 = scalar_lea.vmem %s6, %s485
        $region44: #{tpu_custom_call.1} parent=15 // pred_fallthru
          _
        // Predicated region
        $region45: #{tpu_custom_call.1} parent=15 // pred_check
          %p487 = pneg %p240
        $region46: #{tpu_custom_call.1} parent=15 // pred_check_branch
          %489 = sbr.rel (%p487) target = $region48
        $region47: #{tpu_custom_call.1} parent=15 // pred_region
          %p490 = scmp.lt.s32.totalorder %s29, 1
          %s491 = scalar_select %p490, %s29, 1
          %s492 = smul.addr %s491, 2
          %s493 = smul.addr %s492, 8
          %s494 = scalar_lea.vmem %s7, %s493
        $region48: #{tpu_custom_call.1} parent=15 // pred_fallthru
          _
        // Predicated region
        $region49: #{tpu_custom_call.1} parent=15 // pred_check
          %p495 = pneg %p268
        $region50: #{tpu_custom_call.1} parent=15 // pred_check_branch
          %497 = sbr.rel (%p495) target = $region52
        $region51: #{tpu_custom_call.1} parent=15 // pred_region
          %p498 = scmp.lt.s32.totalorder %s29, 1
          %s499 = scalar_select %p498, %s29, 1
          %p500 = scmp.lt.s32.totalorder %s30, 0
          %s501 = scalar_select %p500, %s30, 0
          %s502 = sadd.s32 %s501, %s499
          %s503 = scalar_lea.vmem %s8, %s502
        $region52: #{tpu_custom_call.1} parent=15 // pred_fallthru
          _
        // Predicated region
        $region53: #{tpu_custom_call.1} parent=15 // pred_check
          %p504 = pneg %p296
        $region54: #{tpu_custom_call.1} parent=15 // pred_check_branch
          %506 = sbr.rel (%p504) target = $region56
        $region55: #{tpu_custom_call.1} parent=15 // pred_region
          %p507 = scmp.lt.s32.totalorder %s29, 1
          %s508 = scalar_select %p507, %s29, 1
          %p509 = scmp.lt.s32.totalorder %s30, 0
          %s510 = scalar_select %p509, %s30, 0
          %s511 = smul.addr %s508, 2
          %s512 = sadd.s32 %s510, %s511
          %s513 = smul.addr %s512, 8
          %s514 = scalar_lea.vmem %s9, %s513
        $region56: #{tpu_custom_call.1} parent=15 // pred_fallthru
          _
        // Predicated region
        $region57: #{tpu_custom_call.1} parent=15 // pred_check
          %p515 = pneg %p322
        $region58: #{tpu_custom_call.1} parent=15 // pred_check_branch
          %517 = sbr.rel (%p515) target = $region60
        $region59: #{tpu_custom_call.1} parent=15 // pred_region
          %p518 = scmp.lt.s32.totalorder %s29, 1
          %s519 = scalar_select %p518, %s29, 1
          %s520 = smul.addr %s519, 2
          %s521 = smul.addr %s520, 8
          %s522 = scalar_lea.vmem %s10, %s521
        $region60: #{tpu_custom_call.1} parent=15 // pred_fallthru
          _
        // Predicated region
        $region61: #{tpu_custom_call.1} parent=15 // pred_check
          %p523 = pneg %p348
        $region62: #{tpu_custom_call.1} parent=15 // pred_check_branch
          %525 = sbr.rel (%p523) target = $region64
        $region63: #{tpu_custom_call.1} parent=15 // pred_region
          %p526 = scmp.lt.s32.totalorder %s29, 1
          %s527 = scalar_select %p526, %s29, 1
          %s528 = smul.addr %s527, 2
          %s529 = smul.addr %s528, 8
          %s530 = scalar_lea.vmem %s11, %s529
        $region64: #{tpu_custom_call.1} parent=15 // pred_fallthru
          _
        // Predicated region
        $region65: #{tpu_custom_call.1} parent=15 // pred_check
          %p531 = pneg %p374
        $region66: #{tpu_custom_call.1} parent=15 // pred_check_branch
          %533 = sbr.rel (%p531) target = $region68
        $region67: #{tpu_custom_call.1} parent=15 // pred_region
          %p534 = scmp.lt.s32.totalorder %s29, 1
          %s535 = scalar_select %p534, %s29, 1
          %s536 = smul.addr %s535, 2
          %s537 = smul.addr %s536, 8
          %s538 = scalar_lea.vmem %s12, %s537
        $region68: #{tpu_custom_call.1} parent=15 // pred_fallthru
          _
      $region16: #{tpu_custom_call.1} parent=5 // pred_fallthru
        _
      %p539 = scmp.le.s32.totalorder 1, %s22
      %p540 = scmp.lt.s32.totalorder %s22, 3
      %p541 = pnand %p539, %p540
      %p542 = pneg %p541
      // Predicated region
      $region69: #{tpu_custom_call.1} parent=5 // pred_check
        _
      $region70: #{tpu_custom_call.1} parent=5 // pred_check_branch
        %544 = sbr.rel (%p541) target = $region72
      $region71: #{tpu_custom_call.1} parent=5 // pred_region
        %s545 = ssub.s32 %s22, 1
        %p546 = scmp.lt.s32.totalorder %s31, 1
        %s547 = scalar_select %p546, %s31, 1
        %s548 = smul.addr %s547, 2
        %s549 = smul.addr %s548, 8
        %s550 = scalar_lea.vmem %s0, %s549
        %p551 = pneg %p60
        %p552 = pneg %p57
        %p553 = scmp.lt.s32.totalorder %s31, 1
        %s554 = scalar_select %p553, %s31, 1
        %s555 = smul.addr %s554, 2
        %s556 = smul.addr %s555, 8
        %s557 = scalar_lea.vmem %s1, %s556
        %p558 = pneg %p86
        %p559 = pneg %p83
        %p560 = scmp.lt.s32.totalorder %s31, 1
        %s561 = scalar_select %p560, %s31, 1
        %s562 = smul.addr %s561, 2
        %s563 = smul.addr %s562, 8
        %s564 = scalar_lea.vmem %s2, %s563
        %p565 = pneg %p112
        %p566 = pneg %p109
        %p567 = scmp.lt.s32.totalorder %s31, 1
        %s568 = scalar_select %p567, %s31, 1
        %s569 = smul.addr %s568, 2
        %s570 = smul.addr %s569, 8
        %s571 = scalar_lea.vmem %s3, %s570
        %p572 = pneg %p138
        %p573 = pneg %p135
        %s574 = smul.u32 2, %s32
        %p575 = scmp.lt.s32.totalorder %s31, 1
        %s576 = scalar_select %p575, %s31, 1
        %p577 = scmp.lt.s32.totalorder %s574, 1
        %s578 = scalar_select %p577, %s574, 1
        %s579 = smul.addr %s576, 2
        %s580 = sadd.s32 %s578, %s579
        %s581 = smul.addr %s580, 8
        %s582 = scalar_lea.vmem %s4, %s581
        %p583 = pneg %p166
        %p584 = pneg %p163
        %p585 = scmp.lt.s32.totalorder %s31, 1
        %s586 = scalar_select %p585, %s31, 1
        %s587 = smul.addr %s586, 2
        %s588 = smul.addr %s587, 8
        %s589 = scalar_lea.vmem %s5, %s588
        %p590 = pneg %p192
        %p591 = pneg %p189
        %p592 = scmp.lt.s32.totalorder %s31, 1
        %s593 = scalar_select %p592, %s31, 1
        %p594 = scmp.lt.s32.totalorder %s32, 0
        %s595 = scalar_select %p594, %s32, 0
        %s596 = sadd.s32 %s595, %s593
        %s597 = scalar_lea.vmem %s6, %s596
        %p598 = pneg %p220
        %p599 = pneg %p217
        %p600 = scmp.lt.s32.totalorder %s31, 1
        %s601 = scalar_select %p600, %s31, 1
        %s602 = smul.addr %s601, 2
        %s603 = smul.addr %s602, 8
        %s604 = scalar_lea.vmem %s7, %s603
        %p605 = pneg %p246
        %p606 = pneg %p243
        %p607 = scmp.lt.s32.totalorder %s31, 1
        %s608 = scalar_select %p607, %s31, 1
        %p609 = scmp.lt.s32.totalorder %s32, 0
        %s610 = scalar_select %p609, %s32, 0
        %s611 = sadd.s32 %s610, %s608
        %s612 = scalar_lea.vmem %s8, %s611
        %p613 = pneg %p274
        %p614 = pneg %p271
        %p615 = scmp.lt.s32.totalorder %s31, 1
        %s616 = scalar_select %p615, %s31, 1
        %p617 = scmp.lt.s32.totalorder %s32, 0
        %s618 = scalar_select %p617, %s32, 0
        %s619 = smul.addr %s616, 2
        %s620 = sadd.s32 %s618, %s619
        %s621 = smul.addr %s620, 8
        %s622 = scalar_lea.vmem %s9, %s621
        %p623 = pneg %p302
        %p624 = pneg %p299
        %p625 = scmp.lt.s32.totalorder %s31, 1
        %s626 = scalar_select %p625, %s31, 1
        %s627 = smul.addr %s626, 2
        %s628 = smul.addr %s627, 8
        %s629 = scalar_lea.vmem %s10, %s628
        %p630 = pneg %p328
        %p631 = pneg %p325
        %p632 = scmp.lt.s32.totalorder %s31, 1
        %s633 = scalar_select %p632, %s31, 1
        %s634 = smul.addr %s633, 2
        %s635 = smul.addr %s634, 8
        %s636 = scalar_lea.vmem %s11, %s635
        %p637 = pneg %p354
        %p638 = pneg %p351
        %p639 = scmp.lt.s32.totalorder %s31, 1
        %s640 = scalar_select %p639, %s31, 1
        %s641 = smul.addr %s640, 2
        %s642 = smul.addr %s641, 8
        %s643 = scalar_lea.vmem %s12, %s642
        %p644 = pneg %p380
        %p645 = pneg %p377
        %p646 = pneg %p406
        %p647 = pneg %p403
        %s648 = sand.u32 %s393, 1
        %s649 = scalar_lea.sflag [#allocation3], %s648
        %s650 = sand.u32 %s393, 1
        %s651 = smul.addr %s650, 8
        %s652 = scalar_lea.vmem [#allocation2], %s651
        %p653 = scmp.lt.s32.totalorder %s31, 1
        %s654 = scalar_select %p653, %s31, 1
        %s655 = smul.addr %s654, 2
        %s656 = smul.addr %s655, 8
        %s657 = scalar_lea.vmem %s0, %s656
        %p658 = scmp.lt.s32.totalorder %s31, 1
        %s659 = scalar_select %p658, %s31, 1
        %s660 = smul.addr %s659, 2
        %s661 = smul.addr %s660, 8
        %s662 = scalar_lea.vmem %s1, %s661
        %p663 = scmp.lt.s32.totalorder %s31, 1
        %s664 = scalar_select %p663, %s31, 1
        %s665 = smul.addr %s664, 2
        %s666 = smul.addr %s665, 8
        %s667 = scalar_lea.vmem %s2, %s666
        %p668 = scmp.lt.s32.totalorder %s31, 1
        %s669 = scalar_select %p668, %s31, 1
        %s670 = smul.addr %s669, 2
        %s671 = smul.addr %s670, 8
        %s672 = scalar_lea.vmem %s3, %s671
        %s673 = smul.u32 2, %s32
        %p674 = scmp.lt.s32.totalorder %s31, 1
        %s675 = scalar_select %p674, %s31, 1
        %p676 = scmp.lt.s32.totalorder %s673, 1
        %s677 = scalar_select %p676, %s673, 1
        %s678 = smul.addr %s675, 2
        %s679 = sadd.s32 %s677, %s678
        %s680 = smul.addr %s679, 8
        %s681 = scalar_lea.vmem %s4, %s680
        %s682 = smul.u32 2, %s32
        %p683 = scmp.lt.s32.totalorder %s31, 1
        %s684 = scalar_select %p683, %s31, 1
        %s685 = smul.addr %s684, 2
        %s686 = smul.addr %s685, 8
        %s687 = scalar_lea.vmem %s5, %s686
        %p688 = scmp.lt.s32.totalorder %s31, 1
        %s689 = scalar_select %p688, %s31, 1
        %p690 = scmp.lt.s32.totalorder %s32, 0
        %s691 = scalar_select %p690, %s32, 0
        %s692 = sadd.s32 %s691, %s689
        %s693 = scalar_lea.vmem %s6, %s692
        %p694 = scmp.lt.s32.totalorder %s31, 1
        %s695 = scalar_select %p694, %s31, 1
        %s696 = smul.addr %s695, 2
        %s697 = smul.addr %s696, 8
        %s698 = scalar_lea.vmem %s7, %s697
        %p699 = scmp.lt.s32.totalorder %s31, 1
        %s700 = scalar_select %p699, %s31, 1
        %p701 = scmp.lt.s32.totalorder %s32, 0
        %s702 = scalar_select %p701, %s32, 0
        %s703 = sadd.s32 %s702, %s700
        %s704 = scalar_lea.vmem %s8, %s703
        %p705 = scmp.lt.s32.totalorder %s31, 1
        %s706 = scalar_select %p705, %s31, 1
        %p707 = scmp.lt.s32.totalorder %s32, 0
        %s708 = scalar_select %p707, %s32, 0
        %s709 = smul.addr %s706, 2
        %s710 = sadd.s32 %s708, %s709
        %s711 = smul.addr %s710, 8
        %s712 = scalar_lea.vmem %s9, %s711
        %p713 = scmp.lt.s32.totalorder %s31, 1
        %s714 = scalar_select %p713, %s31, 1
        %s715 = smul.addr %s714, 2
        %s716 = smul.addr %s715, 8
        %s717 = scalar_lea.vmem %s10, %s716
        %p718 = scmp.lt.s32.totalorder %s31, 1
        %s719 = scalar_select %p718, %s31, 1
        %s720 = smul.addr %s719, 2
        %s721 = smul.addr %s720, 8
        %s722 = scalar_lea.vmem %s11, %s721
        %p723 = scmp.lt.s32.totalorder %s31, 1
        %s724 = scalar_select %p723, %s31, 1
        %s725 = smul.addr %s724, 2
        %s726 = smul.addr %s725, 8
        %s727 = scalar_lea.vmem %s12, %s726
        %p728 = scmp.eq.s32.totalorder %s32, 0
        // Predicated region
        $region73: #{tpu_custom_call.1} parent=71 // pred_check
          %p729 = pneg %p728
        $region74: #{tpu_custom_call.1} parent=71 // pred_check_branch
          %731 = sbr.rel (%p729) target = $region76
        $region75: #{tpu_custom_call.1} parent=71 // pred_region
          %v732 = vld [vmem:[%s667] sm:$0xff]
          %v733 = vld [vmem:[%s667 + $0x8] sm:$0xff]
          %v734 = vld [vmem:[%s657] sm:$0xff]
          %v735 = vld [vmem:[%s657 + $0x8] sm:$0xff]
          %v736 = vld [vmem:[%s662] sm:$0xff]
          %v737 = vld [vmem:[%s662 + $0x8] sm:$0xff]
          %vm738 = vcmask 261120
          %v739 = vsel %vm738, %v732, -inf
          %740 = vmax.xlane.f32.xlu0 %v739
          %v741 = vpop.xlane.xlu0 %740
          %v742 = vsel %vm738, %v733, -inf
          %743 = vmax.xlane.f32.xlu0 %v742
          %v744 = vpop.xlane.xlu0 %743
          %v745 = vsub.f32 %v732, %v741
          %v746 = vsub.f32 %v733, %v744
          %v747 = vmul.f32 %v745, 1.442695
          %v748 = vpow.pop %v747
          %v749 = vmul.f32 %v746, 1.442695
          %v750 = vpow.pop %v749
          %v751 = vsel %vm738, %v748, 0.0
          %752 = vadd.xlane.f32.xlu0 %v751
          %v753 = vpop.xlane.xlu0 %752
          %v754 = vsel %vm738, %v750, 0.0
          %755 = vadd.xlane.f32.xlu0 %v754
          %v756 = vpop.xlane.xlu0 %755
          %v757 = vlog2.pop %v753
          %v758 = vmul.f32 %v757, 0.6931472
          %v759 = vlog2.pop %v756
          %v760 = vmul.f32 %v759, 0.6931472
          %v761 = vsub.f32 %v745, %v758
          %v762 = vsub.f32 %v746, %v760
          %v763 = vlaneseq
          %v764 = vand.u32 %v763, 127
          %765 = vset.pattern.permute.xlu0 0
          %766 = vperm.xlu0 %765, %v734
          %v767 = vpop.permute.xlu0 %766
          %768 = vset.pattern.permute.xlu0 0
          %769 = vperm.xlu0 %768, %v735
          %v770 = vpop.permute.xlu0 %769
          %vm771 = vcmp.eq.s32.totalorder %v764, %v767
          %vm772 = vcmp.eq.s32.totalorder %v764, %v770
          %v773 = vsel %vm771, 1, 0
          %v774 = vsel %vm772, 1, 0
          %v775 = vcvt.s32.f32 %v773
          %v776 = vcvt.s32.f32 %v774
          %v777 = vmul.f32 %v761, %v775
          %v778 = vmul.f32 %v762, %v776
          %v779 = vsel %vm738, %v777, 0.0
          %780 = vadd.xlane.f32.xlu0 %v779
          %v781 = vpop.xlane.xlu0 %780
          %v782 = vsel %vm738, %v778, 0.0
          %783 = vadd.xlane.f32.xlu0 %v782
          %v784 = vpop.xlane.xlu0 %783
          %v785 = vsel %vm738, %v761, 0.0
          %786 = vadd.xlane.f32.xlu0 %v785
          %v787 = vpop.xlane.xlu0 %786
          %v788 = vsel %vm738, %v762, 0.0
          %789 = vadd.xlane.f32.xlu0 %v788
          %v790 = vpop.xlane.xlu0 %789
          %v791 = vmul.f32 %v781, 0.95
          %v792 = vmul.f32 %v784, 0.95
          %v793 = vmul.f32 %v787, 0.0015625
          %v794 = vmul.f32 %v790, 0.0015625
          %v795 = vadd.f32 %v791, %v793
          %v796 = vadd.f32 %v792, %v794
          %v797 = vsub.f32 0.0, %v795
          %v798 = vsub.f32 0.0, %v796
          %v799 = vmul.f32 %v797, %v736
          %v800 = vmul.f32 %v798, %v737
          %vm801 = vcmask 7168
          %v802 = vsel %vm801, %v799, 0.0
          %v803 = vsel %vm801, %v800, 0.0
          %v804 = vadd.f32 %v802, %v803
          %805 = vadd.xlane.f32.xlu0 %v804
          %v806 = vpop.xlane.xlu0 %805
          %v807 = vrot.slane %v806, 4
          %v808 = vadd.f32 %v806, %v807
          %v809 = vrot.slane %v808, 2
          %v810 = vadd.f32 %v808, %v809
          %v811 = vrot.slane %v810, 1
          %v812 = vadd.f32 %v810, %v811
          %s813 = vtos %v812
          %v814 = vsel %vm801, %v736, 0.0
          %v815 = vsel %vm801, %v737, 0.0
          %v816 = vadd.f32 %v814, %v815
          %817 = vadd.xlane.f32.xlu0 %v816
          %v818 = vpop.xlane.xlu0 %817
          %v819 = vrot.slane %v818, 4
          %v820 = vadd.f32 %v818, %v819
          %v821 = vrot.slane %v820, 2
          %v822 = vadd.f32 %v820, %v821
          %v823 = vrot.slane %v822, 1
          %v824 = vadd.f32 %v822, %v823
          %s825 = vtos %v824
          %vm826 = vcmp.eq.f32.partialorder %v732, %v741
          %vm827 = vcmp.eq.f32.partialorder %v733, %v744
          %v828 = vcvt.s32.f32 %v764
          %v829 = vsel %vm826, %v828, 32.0
          %v830 = vsel %vm827, %v828, 32.0
          %v831 = vsel %vm738, %v829, inf
          %832 = vmin.xlane.f32.xlu0 %v831
          %v833 = vpop.xlane.xlu0 %832
          %v834 = vsel %vm738, %v830, inf
          %835 = vmin.xlane.f32.xlu0 %v834
          %v836 = vpop.xlane.xlu0 %835
          %v837 = vcvt.s32.f32 %v734
          %v838 = vcvt.s32.f32 %v735
          %vm839 = vcmp.eq.f32.partialorder %v833, %v837
          %vm840 = vcmp.eq.f32.partialorder %v836, %v838
          %v841 = vsel %vm839, 1, 0
          %v842 = vsel %vm840, 1, 0
          %v843 = vcvt.s32.f32 %v841
          %v844 = vcvt.s32.f32 %v842
          %v845 = vmul.f32 %v843, %v736
          %v846 = vmul.f32 %v844, %v737
          %v847 = vsel %vm801, %v845, 0.0
          %v848 = vsel %vm801, %v846, 0.0
          %v849 = vadd.f32 %v847, %v848
          %850 = vadd.xlane.f32.xlu0 %v849
          %v851 = vpop.xlane.xlu0 %850
          %v852 = vrot.slane %v851, 4
          %v853 = vadd.f32 %v851, %v852
          %v854 = vrot.slane %v853, 2
          %v855 = vadd.f32 %v853, %v854
          %v856 = vrot.slane %v855, 1
          %v857 = vadd.f32 %v855, %v856
          %s858 = vtos %v857
          %v859 = vld [vmem:[%s717] sm:$0xff]
          %v860 = vld [vmem:[%s717 + $0x8] sm:$0xff]
          %v861 = vld [vmem:[%s722] sm:$0xff]
          %v862 = vld [vmem:[%s722 + $0x8] sm:$0xff]
          %v863 = vld [vmem:[%s727] sm:$0xff]
          %v864 = vld [vmem:[%s727 + $0x8] sm:$0xff]
          %v865 = vsub.f32 %v861, %v863
          %v866 = vsub.f32 %v862, %v864
          %v867 = vmul.f32 %v865, %v865
          %v868 = vmul.f32 %v866, %v866
          %v869 = vmul.f32 %v867, %v859
          %v870 = vmul.f32 %v868, %v860
          %vm871 = vcmask 23552
          %v872 = vsel %vm871, %v869, 0.0
          %v873 = vsel %vm871, %v870, 0.0
          %v874 = vadd.f32 %v872, %v873
          %875 = vadd.xlane.f32.xlu0 %v874
          %v876 = vpop.xlane.xlu0 %875
          %v877 = vrot.slane %v876, 4
          %v878 = vadd.f32 %v876, %v877
          %v879 = vrot.slane %v878, 2
          %v880 = vadd.f32 %v878, %v879
          %v881 = vrot.slane %v880, 1
          %v882 = vadd.f32 %v880, %v881
          %s883 = vtos %v882
          %v884 = vsel %vm871, %v859, 0.0
          %v885 = vsel %vm871, %v860, 0.0
          %v886 = vadd.f32 %v884, %v885
          %887 = vadd.xlane.f32.xlu0 %v886
          %v888 = vpop.xlane.xlu0 %887
          %v889 = vrot.slane %v888, 4
          %v890 = vadd.f32 %v888, %v889
          %v891 = vrot.slane %v890, 2
          %v892 = vadd.f32 %v890, %v891
          %v893 = vrot.slane %v892, 1
          %v894 = vadd.f32 %v892, %v893
          %s895 = vtos %v894
          %v896 = vstv %s813
          %897 = vst [vmem:[%s652] sm:$0x1] %v896
          %v898 = vstv %s825
          %899 = vst [vmem:[%s652 + $0x1] sm:$0x1] %v898
          %v900 = vstv %s858
          %901 = vst [vmem:[%s652 + $0x2] sm:$0x1] %v900
          %902 = vst [vmem:[%s652 + $0x3] sm:$0x3] 0.0
          %v903 = vstv %s883
          %904 = vst [vmem:[%s652 + $0x5] sm:$0x1] %v903
          %v905 = vstv %s895
          %906 = vst [vmem:[%s652 + $0x6] sm:$0x1] %v905
          %907 = vst [vmem:[%s652 + $0x7] sm:$0x1] 0.0
        $region76: #{tpu_custom_call.1} parent=71 // pred_fallthru
          _
        %v908 = vld [vmem:[%s672] sm:$0xff]
        %v909 = vld [vmem:[%s672 + $0x8] sm:$0xff]
        %v910 = vld [vmem:[%s681] sm:$0xff]
        %v911 = vld [vmem:[%s681 + $0x8] sm:$0xff]
        %vm912 = vcmask 64512
        %v914 = vsel %vm912, %v908, 0
        %v917 = vsel %vm912, %v909, 0
        %v920 = vsel %vm912, %v910, 0
        %v923 = vsel %vm912, %v911, 0
        %925 = vmatprep.subr.mxu0 0.0
        %926 = vmatpush1.xpose.msra.mxu0 0.0
        %927 = vmatprep.subr.mxu0 0.0
        %928 = vmatpush1.xpose.msra.mxu0 0.0
        %929 = vmatprep.subr.mxu0 0.0
        %930 = vmatpush1.xpose.msra.mxu0 0.0
        %931 = vmatprep.subr.mxu0 0.0
        %932 = vmatpush1.xpose.msra.mxu0 0.0
        %933 = vmatprep.subr.mxu0 0.0
        %934 = vmatpush1.xpose.msra.mxu0 0.0
        %935 = vmatprep.subr.mxu0 0.0
        %936 = vmatpush1.xpose.msra.mxu0 0.0
        %937 = vmatprep.subr.mxu0 0.0
        %938 = vmatpush1.xpose.msra.mxu0 0.0
        %939 = vmatprep.subr.mxu0 0.0
        %940 = vmatpush1.xpose.msra.mxu0 0.0
        %941 = vmatprep.subr.mxu0 0.0
        %942 = vmatpush1.xpose.msra.mxu0 0.0
        %943 = vmatprep.subr.mxu0 0.0
        %944 = vmatpush1.xpose.msra.mxu0 0.0
        %945 = vmatprep.subr.mxu0 0.0
        %946 = vmatpush1.xpose.msra.mxu0 0.0
        %947 = vmatprep.subr.mxu0 0.0
        %948 = vmatpush1.xpose.msra.mxu0 0.0
        %949 = vmatprep.subr.mxu0 0.0
        %950 = vmatpush1.xpose.msra.mxu0 0.0
        %951 = vmatprep.subr.mxu0 0.0
        %952 = vmatpush1.xpose.msra.mxu0 0.0
        %953 = vmatprep.subr.mxu0 0.0
        %954 = vmatpush1.xpose.msra.mxu0 %v923
        %955 = vmatprep.subr.mxu0 0.0
        %956 = vmatpush1.xpose.msra.mxu0 %v920
        %957 = vmatprep.subr.mxu0 0.0
        %958 = vmatpush2.xpose.msra.mxu0 0.0
        %959 = vmatprep.subr.mxu0 0.0
        %960 = vmatpush2.xpose.msra.mxu0 0.0
        %961 = vmatprep.subr.mxu0 0.0
        %962 = vmatpush2.xpose.msra.mxu0 0.0
        %963 = vmatprep.subr.mxu0 0.0
        %964 = vmatpush2.xpose.msra.mxu0 0.0
        %965 = vmatprep.subr.mxu0 0.0
        %966 = vmatpush2.xpose.msra.mxu0 0.0
        %967 = vmatprep.subr.mxu0 0.0
        %968 = vmatpush2.xpose.msra.mxu0 0.0
        %969 = vmatprep.subr.mxu0 0.0
        %970 = vmatpush2.xpose.msra.mxu0 0.0
        %971 = vmatprep.subr.mxu0 0.0
        %972 = vmatpush2.xpose.msra.mxu0 0.0
        %973 = vmatprep.subr.mxu0 0.0
        %974 = vmatpush2.xpose.msra.mxu0 0.0
        %975 = vmatprep.subr.mxu0 0.0
        %976 = vmatpush2.xpose.msra.mxu0 0.0
        %977 = vmatprep.subr.mxu0 0.0
        %978 = vmatpush2.xpose.msra.mxu0 0.0
        %979 = vmatprep.subr.mxu0 0.0
        %980 = vmatpush2.xpose.msra.mxu0 0.0
        %981 = vmatprep.subr.mxu0 0.0
        %982 = vmatpush2.xpose.msra.mxu0 0.0
        %983 = vmatprep.subr.mxu0 0.0
        %984 = vmatpush2.xpose.msra.mxu0 0.0
        %985 = vmatprep.subr.mxu0 0.0
        %986 = vmatpush2.xpose.msra.mxu0 0.0
        %987 = vmatprep.subr.mxu0 0.0
        %988 = vmatpush2.xpose.msra.mxu0 0.0
        %989 = vmatprep.mubr.f32.mxu0 0.0
        %990 = vmatmul.mubr.f32.gmra.mxu0 %v914
        %v991 = vpop.f32.mrf.mxu0
        %v992 = vadd.f32 0.0, %v991
        %v993 = vpop.f32.mrf.mxu0
        %994 = vmatprep.mubr.f32.mxu0 0.0
        %995 = vmatmul.mubr.f32.gmra.mxu0 %v917
        %v996 = vpop.f32.mrf.mxu0
        %v997 = vadd.f32 0.0, %v996
        %v998 = vpop.f32.mrf.mxu0
        %999 = vdwg.mxu0
        %v1000 = vld [vmem:[%s687] sm:$0xff]
        %v1001 = vld [vmem:[%s687 + $0x8] sm:$0xff]
        %v1002 = vld [vmem:[%s693] sm:$0x1]
        %1004 = vset.pattern.permute.xlu0 0
        %1005 = vperm.xlu0 %1004, %v1000
        %v1006 = vpop.permute.xlu0 %1005
        %1009 = vset.pattern.permute.xlu0 0
        %1010 = vperm.xlu0 %1009, %v1001
        %v1011 = vpop.permute.xlu0 %1010
        %v1014 = vlaneseq
        %v1015 = vshrl.u32 %v1014, 7
        %v1016 = vsub.s32 0, %v1015
        %v1017 = vrot.slane %v1002, %v1016
        %v1019 = vadd.f32 %v1006, %v1017
        %v1020 = vadd.f32 %v1011, %v1017
        %v1021 = vmul.f32 %v992, 2.0
        %v1022 = vmul.f32 %v997, 2.0
        %v1023 = vsub.f32 %v1019, %v1021
        %v1024 = vsub.f32 %v1020, %v1022
        %v1025 = vmax.f32 %v1023, 0.0
        %v1026 = vmax.f32 %v1024, 0.0
        %v1027 = vrsqrt.pop %v1025
        %v1028 = vmul.f32 %v1025, %v1027
        %vm1029 = vcmp.eq.f32.partialorder %v1025, inf
        %v1030 = vsel %vm1029, %v1025, %v1028
        %vm1031 = vcmp.eq.f32.partialorder %v1025, 0.0
        %v1032 = vand.u32 %v1025, 2147483648
        %v1033 = vsel %vm1031, %v1032, %v1030
        %v1034 = vrsqrt.pop %v1026
        %v1035 = vmul.f32 %v1026, %v1034
        %vm1036 = vcmp.eq.f32.partialorder %v1026, inf
        %v1037 = vsel %vm1036, %v1026, %v1035
        %vm1038 = vcmp.eq.f32.partialorder %v1026, 0.0
        %v1039 = vand.u32 %v1026, 2147483648
        %v1040 = vsel %vm1038, %v1039, %v1037
        %v1041 = vld [vmem:[%s698] sm:$0xff]
        %v1042 = vld [vmem:[%s698 + $0x8] sm:$0xff]
        %v1043 = vld [vmem:[%s704] sm:$0x1]
        %1044 = vset.pattern.permute.xlu0 0
        %1045 = vperm.xlu0 %1044, %v1041
        %v1046 = vpop.permute.xlu0 %1045
        %1047 = vset.pattern.permute.xlu0 0
        %1048 = vperm.xlu0 %1047, %v1042
        %v1049 = vpop.permute.xlu0 %1048
        %v1050 = vlaneseq
        %v1051 = vshrl.u32 %v1050, 7
        %v1052 = vsub.s32 0, %v1051
        %v1053 = vrot.slane %v1043, %v1052
        %vm1054 = vcmp.eq.s32.totalorder %v1046, %v1053
        %vm1055 = vcmp.eq.s32.totalorder %v1049, %v1053
        %vm1056 = vcmp.gt.f32.partialorder %v1033, 0.2
        %vm1057 = vcmp.gt.f32.partialorder %v1040, 0.2
        %vm1058 = vmand %vm1054, %vm1056
        %vm1059 = vmand %vm1055, %vm1057
        %vm1060 = vcmp.lt.f32.partialorder %v1033, 20.0
        %vm1061 = vcmp.lt.f32.partialorder %v1040, 20.0
        %vm1062 = vmand %vm1058, %vm1060
        %vm1063 = vmand %vm1059, %vm1061
        %v1064 = vld [vmem:[%s712] sm:$0xff]
        %v1065 = vld [vmem:[%s712 + $0x8] sm:$0xff]
        %v1066 = vsub.f32 %v1033, %v1064
        %v1067 = vsub.f32 %v1040, %v1065
        %v1068 = vmul.f32 %v1066, %v1066
        %v1069 = vmul.f32 %v1067, %v1067
        %v1070 = vsel %vm1062, %v1068, 0.0
        %v1071 = vsel %vm1063, %v1069, 0.0
        %vm1072 = vcmask 130048
        %v1073 = vsel %vm1072, %v1070, 0.0
        %v1074 = vsel %vm1072, %v1071, 0.0
        %v1075 = vadd.f32 %v1073, %v1074
        %1076 = vadd.xlane.f32.xlu0 %v1075
        %v1077 = vpop.xlane.xlu0 %1076
        %v1078 = vrot.slane %v1077, 4
        %v1079 = vadd.f32 %v1077, %v1078
        %v1080 = vrot.slane %v1079, 2
        %v1081 = vadd.f32 %v1079, %v1080
        %v1082 = vrot.slane %v1081, 1
        %v1083 = vadd.f32 %v1081, %v1082
        %s1084 = vtos %v1083
        %v1085 = vsel %vm1062, 1, 0
        %v1086 = vsel %vm1063, 1, 0
        %v1087 = vcvt.s32.f32 %v1085
        %v1088 = vcvt.s32.f32 %v1086
        %v1089 = vsel %vm1072, %v1087, 0.0
        %v1090 = vsel %vm1072, %v1088, 0.0
        %v1091 = vadd.f32 %v1089, %v1090
        %1092 = vadd.xlane.f32.xlu0 %v1091
        %v1093 = vpop.xlane.xlu0 %1092
        %v1094 = vrot.slane %v1093, 4
        %v1095 = vadd.f32 %v1093, %v1094
        %v1096 = vrot.slane %v1095, 2
        %v1097 = vadd.f32 %v1095, %v1096
        %v1098 = vrot.slane %v1097, 1
        %v1099 = vadd.f32 %v1097, %v1098
        %s1100 = vtos %v1099
        %v1101 = vld [vmem:[%s652 + $0x3] sm:$0x1]
        %v1102 = vstv %s1084
        %v1103 = vadd.f32 %v1101, %v1102
        %1104 = vst [vmem:[%s652 + $0x3] sm:$0x1] %v1103
        %v1105 = vld [vmem:[%s652 + $0x4] sm:$0x1]
        %v1106 = vstv %s1100
        %v1107 = vadd.f32 %v1105, %v1106
        %1108 = vst [vmem:[%s652 + $0x4] sm:$0x1] %v1107
        %s1109 = sand.u32 %s393, 1
        %s1110 = scalar_lea.sflag [#allocation3], %s1109
        %s1111 = sand.u32 %s393, 1
        %s1112 = smul.addr %s1111, 8
        %s1113 = scalar_lea.vmem [#allocation2], %s1112
        // Predicated region
        $region77: #{tpu_custom_call.1} parent=71 // pred_check
          %p1114 = pneg %p403
        $region78: #{tpu_custom_call.1} parent=71 // pred_check_branch
          %1116 = sbr.rel (%p1114) target = $region80
        $region79: #{tpu_custom_call.1} parent=71 // pred_region
          %s1118 = ssub.s32 128, 128
          %1119 = vsyncadd %s1110, %s1118
          %s1120 = smul.addr %s31, 128
          %s1121 = scalar_lea.hbm %s13, %s1120
          %s1123 = sshll.u32 %s1113, 4
          %s1124 = int_to_ptr.vmem [resolvable:$true] %s1123
          %1126 = dma.vmem_to_hbm [thread:$0]  %s1124, 128, %s1121, %s1110
        $region80: #{tpu_custom_call.1} parent=71 // pred_fallthru
          _
      $region72: #{tpu_custom_call.1} parent=5 // pred_fallthru
        _
      %p1127 = scmp.le.s32.totalorder 2, %s22
      // Predicated region
      $region81: #{tpu_custom_call.1} parent=5 // pred_check
        %p1128 = pneg %p1127
      $region82: #{tpu_custom_call.1} parent=5 // pred_check_branch
        %1130 = sbr.rel (%p1128) target = $region84
      $region83: #{tpu_custom_call.1} parent=5 // pred_region
        %s1131 = ssub.s32 %s22, 2
        // Predicated region
        $region85: #{tpu_custom_call.1} parent=83 // pred_check
          %p1132 = pneg %p409
        $region86: #{tpu_custom_call.1} parent=83 // pred_check_branch
          %1134 = sbr.rel (%p1132) target = $region88
        $region87: #{tpu_custom_call.1} parent=83 // pred_region
          %s1135 = sand.u32 %s394, 1
          %s1136 = scalar_lea.sflag [#allocation3], %s1135
          %s1137 = sand.u32 %s394, 1
          %s1138 = smul.addr %s1137, 8
          %s1139 = scalar_lea.vmem [#allocation2], %s1138
          %1140 = dma.done %s1136, 128
        $region88: #{tpu_custom_call.1} parent=83 // pred_fallthru
          _
      $region84: #{tpu_custom_call.1} parent=5 // pred_fallthru
        _
    $region6: #{tpu_custom_call.1} parent=1 // loop_footer
      %s26 = sadd.s32 1, %s22
    $region7: #{tpu_custom_call.1} parent=1 // loop_footer_branch
      %21 = sbr.rel target = $region3
    $region8: #{tpu_custom_call.1} parent=1 // loop_exit
      _
    %1141 = vsyncpa [#allocation3], 1
    %s1142 = scalar_lea.sflag [#allocation3], 1
    %1143 = vsyncpa %s1142, 1

</llo_original>
